<compile_context>
chip_gen: v5e
topology: v5e:2x2
jax: 0.10.0
libtpu: 0.0.40
codegen_flags: <defaults>
</compile_context>

<pallas_src>
import functools

import jax
import jax.numpy as jnp
from jax.experimental import pallas as pl
from jax.experimental.pallas import tpu as pltpu

N3_PAD = 128            # lane-dense padding of the 256 -> 1 output layer
COMPUTE_DTYPE = jnp.bfloat16


def _round_up(x, m):
    return ((x + m - 1) // m) * m


def _device_kind():
    try:
        return jax.devices()[0].device_kind.lower()
    except Exception:  # pragma: no cover - defensive
        return ""


def _discriminator_kernel(x_ref, w1_ref, b1_ref, w2_ref, b2_ref, w3_ref, b3_ref,
                          o_ref, *, negative_slope, sigmoid_use):
    """One batch tile of the full 3-layer MLP. Weights are VMEM-resident."""
    # x arrives as f32 straight from HBM; cast to bf16 on the VPU for the MXU.
    x = x_ref[...].astype(COMPUTE_DTYPE)                             # (TB, Dp)

    # Linear 1 + LeakyReLU(0.2): bf16 MXU operands, f32 accumulation.
    h1 = jnp.dot(x, w1_ref[...], preferred_element_type=jnp.float32) + b1_ref[...]
    h1 = jnp.where(h1 >= 0, h1, negative_slope * h1)

    # Linear 2 + LeakyReLU(0.2)
    h2 = jnp.dot(h1.astype(w2_ref.dtype), w2_ref[...],
                 preferred_element_type=jnp.float32) + b2_ref[...]
    h2 = jnp.where(h2 >= 0, h2, negative_slope * h2)

    # Linear 3 (256 -> 128 padded; only column 0 is the real score)
    score = jnp.dot(h2.astype(w3_ref.dtype), w3_ref[...],
                    preferred_element_type=jnp.float32) + b3_ref[...]

    if sigmoid_use:
        score = jax.nn.sigmoid(score)

    o_ref[...] = score.astype(o_ref.dtype)                           # (TB, 128) bf16, unmasked vst


def prepare_params(params, compute_dtype=COMPUTE_DTYPE):
    """One-time weight prep: transpose to (in, out), pad D & last layer, cast for MXU."""
    d_in = params["w1"].shape[1]
    d_pad = _round_up(d_in, 256)                                     # full 256x256 systolic passes
    w1 = params["w1"].T                                              # (D, 512)
    if d_pad != d_in:
        w1 = jnp.pad(w1, ((0, d_pad - d_in), (0, 0)))
    w1 = w1.astype(compute_dtype)                                    # (Dp, 512)
    w2 = params["w2"].T.astype(compute_dtype)                        # (512, 256)
    w3 = params["w3"].T                                              # (256, 1)
    w3 = jnp.pad(w3, ((0, 0), (0, N3_PAD - w3.shape[1]))).astype(compute_dtype)
    b1 = params["b1"].reshape(1, -1).astype(jnp.float32)             # (1, 512)
    b2 = params["b2"].reshape(1, -1).astype(jnp.float32)             # (1, 256)
    b3 = jnp.pad(params["b3"].reshape(1, -1),
                 ((0, 0), (0, N3_PAD - 1))).astype(jnp.float32)      # (1, 128)
    return {"w1": w1, "b1": b1, "w2": w2, "b2": b2, "w3": w3, "b3": b3,
            "d_in": d_in}


def _const_spec(shape, single_buffer):
    """Constant (grid-invariant) BlockSpec; single-buffered on v7x to save VMEM."""
    index_map = lambda i: tuple(0 for _ in shape)
    if single_buffer and hasattr(pl, "Buffered"):
        try:
            return pl.BlockSpec(shape, index_map, pipeline_mode=pl.Buffered(1))
        except Exception:  # older API without pipeline_mode — fall back
            pass
    return pl.BlockSpec(shape, index_map)


def _vmem_budget_bytes(tile_b, d_pad, H1, H2, weight_bufs):
    """Footprint: double-buffered f32 x tile + bf16 out tile, weights x weight_bufs."""
    x_tile = tile_b * d_pad * 4                        # f32 input tile
    out_tile = tile_b * N3_PAD * 2                     # bf16 output tile
    weights = (d_pad * H1 + H1 * H2 + H2 * N3_PAD) * 2 # bf16 resident weights
    biases = (H1 + H2 + N3_PAD) * 4
    total = 2 * (x_tile + out_tile) + weight_bufs * (weights + biases)
    return int(total + (8 << 20))                      # headroom for activations / scratch


def discriminator_forward(image, prepared, *, sigmoid_use):
    """image: (B, C, H, W) float32. prepared: output of prepare_params()."""
    B = image.shape[0]
    x = image.reshape(B, -1)                            # torch .view(B, -1); stays f32 (free reshape)
    d_in = x.shape[1]
    d_pad = prepared["w1"].shape[0]
    H1 = prepared["w1"].shape[1]
    H2 = prepared["w2"].shape[1]
    assert d_in == prepared["d_in"], "image size does not match prepared weights"

    kind = _device_kind()
    is_v7 = "v7" in kind
    is_v5 = "v5" in kind

    # Batch tile: big tiles amortize per-step overhead on v6e/v7x; v5e is already
    # MXU-bound at 256 rows, so keep VMEM/vreg pressure low there.
    cap = 256 if is_v5 else 1024
    tile_b = min(cap, _round_up(B, 16))
    if is_v7 and B > 16:
        # Ensure >= 2 grid steps so both v7x TensorCores get work.
        tile_b = min(tile_b, _round_up(pl.cdiv(B, 2), 16))
    b_pad = _round_up(B, tile_b)

    pads = ((0, b_pad - B), (0, d_pad - d_in))
    if b_pad != B or d_pad != d_in:
        x = jnp.pad(x, pads)
    grid = (b_pad // tile_b,)

    kernel = functools.partial(_discriminator_kernel,
                               negative_slope=0.2,
                               sigmoid_use=sigmoid_use)

    weight_bufs = 1 if is_v7 else 2
    vmem_bytes = _vmem_budget_bytes(tile_b, d_pad, H1, H2, weight_bufs)
    vmem_bytes = min(vmem_bytes, (48 << 20) if is_v7 else (100 << 20))

    out = pl.pallas_call(
        kernel,
        out_shape=jax.ShapeDtypeStruct((b_pad, N3_PAD), jnp.bfloat16),
        grid_spec=pltpu.PrefetchScalarGridSpec(
            num_scalar_prefetch=0,
            grid=grid,
            in_specs=[
                pl.BlockSpec((tile_b, d_pad), lambda i: (i, 0)),       # x tile (pipelined, f32)
                _const_spec((d_pad, H1), is_v7),                       # W1 (resident)
                _const_spec((1, H1), is_v7),                           # b1
                _const_spec((H1, H2), is_v7),                          # W2
                _const_spec((1, H2), is_v7),                           # b2
                _const_spec((H2, N3_PAD), is_v7),                      # W3 (padded)
                _const_spec((1, N3_PAD), is_v7),                       # b3 (padded)
            ],
            out_specs=pl.BlockSpec((tile_b, N3_PAD), lambda i: (i, 0)),
        ),
        compiler_params=pltpu.CompilerParams(
            dimension_semantics=("parallel",),
            vmem_limit_bytes=vmem_bytes,
        ),
    )(x, prepared["w1"], prepared["b1"], prepared["w2"], prepared["b2"],
      prepared["w3"], prepared["b3"])

    return out[:B, :1].astype(jnp.float32)              # real (B, 1) score


def init_params(key, in_features):
    """Deterministic init matching the torch module's parameter shapes/layout."""
    ks = jax.random.split(key, 6)

    def u(k, shape, fan_in):
        bound = 1.0 / jnp.sqrt(fan_in)
        return jax.random.uniform(k, shape, jnp.float32, -bound, bound)

    return {
        "w1": u(ks[0], (512, in_features), in_features),
        "b1": u(ks[1], (512,), in_features),
        "w2": u(ks[2], (256, 512), 512),
        "b2": u(ks[3], (256,), 512),
        "w3": u(ks[4], (1, 256), 256),
        "b3": u(ks[5], (1,), 256),
    }


if __name__ == "__main__":
    key = jax.random.PRNGKey(0)
    k_img, k_par = jax.random.split(key)

    image_size = (4, 16, 16)                    # (C, H, W) -> D = 1024
    batch = 2
    sigmoid_use = True

    image = jax.random.normal(k_img, (batch,) + image_size, dtype=jnp.float32)
    params = init_params(k_par, int(image_size[0] * image_size[1] * image_size[2]))
    prepared = prepare_params(params)           # one-time transpose/pad/cast

    score = discriminator_forward(image, prepared, sigmoid_use=sigmoid_use)
    score = jax.block_until_ready(score)

    # Pure-JAX f32 reference (PyTorch semantics). Tolerance loosened because the
    # kernel uses bf16 MXU operands (f32 accumulation) and a bf16 output slab.
    x = image.reshape(batch, -1)
    h1 = x @ params["w1"].T + params["b1"]
    h1 = jnp.where(h1 >= 0, h1, 0.2 * h1)
    h2 = h1 @ params["w2"].T + params["b2"]
    h2 = jnp.where(h2 >= 0, h2, 0.2 * h2)
    ref = h2 @ params["w3"].T + params["b3"]
    if sigmoid_use:
        ref = jax.nn.sigmoid(ref)

    assert score.shape == (batch, 1)
    assert jnp.allclose(score, ref, atol=2e-2, rtol=2e-2), (score, ref)
    print("KERNEL_OK")
</pallas_src>

<mosaic_0001>
module attributes {stable_mosaic.version = 11 : i64} {
  func.func @_discriminator_kernel(%arg0: i32, %arg1: memref<16x1024xf32, #tpu.memory_space<vmem>>, %arg2: memref<1024x512xbf16, #tpu.memory_space<vmem>>, %arg3: memref<1x512xf32, #tpu.memory_space<vmem>>, %arg4: memref<512x256xbf16, #tpu.memory_space<vmem>>, %arg5: memref<1x256xf32, #tpu.memory_space<vmem>>, %arg6: memref<256x128xbf16, #tpu.memory_space<vmem>>, %arg7: memref<1x128xf32, #tpu.memory_space<vmem>>, %arg8: memref<16x128xbf16, #tpu.memory_space<vmem>>) attributes {dimension_semantics = [#tpu.dimension_semantics<parallel>], iteration_bounds = array<i64: 1>, scalar_prefetch = 0 : i64, scratch_operands = 0 : i64, tpu.core_type = #tpu.core_type<tc>, window_params = [{transform_indices = @transform_0, window_bounds = array<i64: 16, 1024>}, {pipeline_mode = #tpu.pipeline_mode<synchronous>, transform_indices = @transform_1, window_bounds = array<i64: 1024, 512>}, {pipeline_mode = #tpu.pipeline_mode<synchronous>, transform_indices = @transform_2, window_bounds = array<i64: 1, 512>}, {pipeline_mode = #tpu.pipeline_mode<synchronous>, transform_indices = @transform_3, window_bounds = array<i64: 512, 256>}, {pipeline_mode = #tpu.pipeline_mode<synchronous>, transform_indices = @transform_4, window_bounds = array<i64: 1, 256>}, {pipeline_mode = #tpu.pipeline_mode<synchronous>, transform_indices = @transform_5, window_bounds = array<i64: 256, 128>}, {pipeline_mode = #tpu.pipeline_mode<synchronous>, transform_indices = @transform_6, window_bounds = array<i64: 1, 128>}, {transform_indices = @transform_7, window_bounds = array<i64: 16, 128>}]} {
    %c0 = arith.constant 0 : index
    %c0_0 = arith.constant 0 : index
    %0 = vector.load %arg1[%c0, %c0_0] : memref<16x1024xf32, #tpu.memory_space<vmem>>, vector<16x1024xf32>
    %1 = arith.truncf %0 : vector<16x1024xf32> to vector<16x1024xbf16>
    %c0_1 = arith.constant 0 : index
    %c0_2 = arith.constant 0 : index
    %2 = vector.load %arg2[%c0_1, %c0_2] : memref<1024x512xbf16, #tpu.memory_space<vmem>>, vector<1024x512xbf16>
    %cst = arith.constant dense<0.000000e+00> : vector<16x512xf32>
    %3 = tpu.matmul %1, %2, %cst {dimension_numbers = #tpu.dot_dimension_numbers<[1], [0], [0], [1], [0, 0, 1, 1], [], []>} : vector<16x1024xbf16>, vector<1024x512xbf16>, vector<16x512xf32> -> vector<16x512xf32>
    %c0_3 = arith.constant 0 : index
    %c0_4 = arith.constant 0 : index
    %4 = vector.load %arg3[%c0_3, %c0_4] : memref<1x512xf32, #tpu.memory_space<vmem>>, vector<1x512xf32>
    %5 = vector.broadcast %4 : vector<1x512xf32> to vector<16x512xf32>
    %6 = arith.addf %3, %5 : vector<16x512xf32>
    %cst_5 = arith.constant 0.000000e+00 : f32
    %7 = vector.broadcast %cst_5 : f32 to vector<16x512xf32>
    %8 = arith.cmpf oge, %6, %7 : vector<16x512xf32>
    %cst_6 = arith.constant 2.000000e-01 : f32
    %9 = vector.broadcast %cst_6 : f32 to vector<16x512xf32>
    %10 = arith.mulf %9, %6 : vector<16x512xf32>
    %11 = arith.select %8, %6, %10 : vector<16x512xi1>, vector<16x512xf32>
    %12 = arith.truncf %11 : vector<16x512xf32> to vector<16x512xbf16>
    %c0_7 = arith.constant 0 : index
    %c0_8 = arith.constant 0 : index
    %13 = vector.load %arg4[%c0_7, %c0_8] : memref<512x256xbf16, #tpu.memory_space<vmem>>, vector<512x256xbf16>
    %cst_9 = arith.constant dense<0.000000e+00> : vector<16x256xf32>
    %14 = tpu.matmul %12, %13, %cst_9 {dimension_numbers = #tpu.dot_dimension_numbers<[1], [0], [0], [1], [0, 0, 1, 1], [], []>} : vector<16x512xbf16>, vector<512x256xbf16>, vector<16x256xf32> -> vector<16x256xf32>
    %c0_10 = arith.constant 0 : index
    %c0_11 = arith.constant 0 : index
    %15 = vector.load %arg5[%c0_10, %c0_11] : memref<1x256xf32, #tpu.memory_space<vmem>>, vector<1x256xf32>
    %16 = vector.broadcast %15 : vector<1x256xf32> to vector<16x256xf32>
    %17 = arith.addf %14, %16 : vector<16x256xf32>
    %cst_12 = arith.constant 0.000000e+00 : f32
    %18 = vector.broadcast %cst_12 : f32 to vector<16x256xf32>
    %19 = arith.cmpf oge, %17, %18 : vector<16x256xf32>
    %cst_13 = arith.constant 2.000000e-01 : f32
    %20 = vector.broadcast %cst_13 : f32 to vector<16x256xf32>
    %21 = arith.mulf %20, %17 : vector<16x256xf32>
    %22 = arith.select %19, %17, %21 : vector<16x256xi1>, vector<16x256xf32>
    %23 = arith.truncf %22 : vector<16x256xf32> to vector<16x256xbf16>
    %c0_14 = arith.constant 0 : index
    %c0_15 = arith.constant 0 : index
    %24 = vector.load %arg6[%c0_14, %c0_15] : memref<256x128xbf16, #tpu.memory_space<vmem>>, vector<256x128xbf16>
    %cst_16 = arith.constant dense<0.000000e+00> : vector<16x128xf32>
    %25 = tpu.matmul %23, %24, %cst_16 {dimension_numbers = #tpu.dot_dimension_numbers<[1], [0], [0], [1], [0, 0, 1, 1], [], []>} : vector<16x256xbf16>, vector<256x128xbf16>, vector<16x128xf32> -> vector<16x128xf32>
    %c0_17 = arith.constant 0 : index
    %c0_18 = arith.constant 0 : index
    %26 = vector.load %arg7[%c0_17, %c0_18] : memref<1x128xf32, #tpu.memory_space<vmem>>, vector<1x128xf32>
    %27 = vector.broadcast %26 : vector<1x128xf32> to vector<16x128xf32>
    %28 = arith.addf %25, %27 : vector<16x128xf32>
    %29 = arith.negf %28 : vector<16x128xf32>
    %30 = math.exp %29 : vector<16x128xf32>
    %cst_19 = arith.constant 1.000000e+00 : f32
    %31 = vector.broadcast %cst_19 : f32 to vector<16x128xf32>
    %32 = arith.addf %31, %30 : vector<16x128xf32>
    %33 = arith.divf %31, %32 : vector<16x128xf32>
    %34 = arith.truncf %33 : vector<16x128xf32> to vector<16x128xbf16>
    %c0_20 = arith.constant 0 : index
    %c0_21 = arith.constant 0 : index
    %35 = vector.load %arg8[%c0_20, %c0_21] : memref<16x128xbf16, #tpu.memory_space<vmem>>, vector<16x128xbf16>
    tpu.vector_store %arg8[%c0_20, %c0_21], %34 {strides = array<i32>} : memref<16x128xbf16, #tpu.memory_space<vmem>>, vector<16x128xbf16>,
    return
  }
  func.func @transform_0(%arg0: i32) -> (i32, i32) {
    %c0_i32 = arith.constant 0 : i32
    %c0_i32_0 = arith.constant 0 : i32
    return %arg0, %c0_i32 : i32, i32
  }
  func.func @transform_1(%arg0: i32) -> (i32, i32) {
    %c0_i32 = arith.constant 0 : i32
    %c0_i32_0 = arith.constant 0 : i32
    %c0_i32_1 = arith.constant 0 : i32
    return %c0_i32, %c0_i32_0 : i32, i32
  }
  func.func @transform_2(%arg0: i32) -> (i32, i32) {
    %c0_i32 = arith.constant 0 : i32
    %c0_i32_0 = arith.constant 0 : i32
    %c0_i32_1 = arith.constant 0 : i32
    return %c0_i32, %c0_i32_0 : i32, i32
  }
  func.func @transform_3(%arg0: i32) -> (i32, i32) {
    %c0_i32 = arith.constant 0 : i32
    %c0_i32_0 = arith.constant 0 : i32
    %c0_i32_1 = arith.constant 0 : i32
    return %c0_i32, %c0_i32_0 : i32, i32
  }
  func.func @transform_4(%arg0: i32) -> (i32, i32) {
    %c0_i32 = arith.constant 0 : i32
    %c0_i32_0 = arith.constant 0 : i32
    %c0_i32_1 = arith.constant 0 : i32
    return %c0_i32, %c0_i32_0 : i32, i32
  }
  func.func @transform_5(%arg0: i32) -> (i32, i32) {
    %c0_i32 = arith.constant 0 : i32
    %c0_i32_0 = arith.constant 0 : i32
    %c0_i32_1 = arith.constant 0 : i32
    return %c0_i32, %c0_i32_0 : i32, i32
  }
  func.func @transform_6(%arg0: i32) -> (i32, i32) {
    %c0_i32 = arith.constant 0 : i32
    %c0_i32_0 = arith.constant 0 : i32
    %c0_i32_1 = arith.constant 0 : i32
    return %c0_i32, %c0_i32_0 : i32, i32
  }
  func.func @transform_7(%arg0: i32) -> (i32, i32) {
    %c0_i32 = arith.constant 0 : i32
    %c0_i32_0 = arith.constant 0 : i32
    return %arg0, %c0_i32 : i32, i32
  }
}

</mosaic_0001>

<llo_original>
// kernel: tpu_custom_call.1
$region0: #{tpu_custom_call.1}
  #allocation0 [shape = 'u32[]', space=smem, size = 0x4, offset = 0x4, fixed_abs, tag = 'smem constant byte address 0x4 - core index']
  #allocation1 [shape = 'u32[72,128]{1,0:T(1,128)}', space=vmem, size = 0x9000, scoped, tag = 'internal scratch']
  %s0 = inlined_call_operand.hbm [shape: f32[16,1024], index: 0, kind: input, shape index: {}]
  %s1 = inlined_call_operand.hbm [shape: bf16[1024,512], index: 1, kind: input, shape index: {}]
  %s2 = inlined_call_operand.hbm [shape: f32[1,512], index: 2, kind: input, shape index: {}]
  %s3 = inlined_call_operand.hbm [shape: bf16[512,256], index: 3, kind: input, shape index: {}]
  %s4 = inlined_call_operand.vmem [shape: f32[1,256], index: 4, kind: input, shape index: {}]
  %s5 = inlined_call_operand.hbm [shape: bf16[256,128], index: 5, kind: input, shape index: {}]
  %s6 = inlined_call_operand.vmem [shape: f32[1,128], index: 6, kind: input, shape index: {}]
  %s7 = inlined_call_operand.hbm [shape: bf16[16,128], index: 7, kind: output, shape index: {}]
  %s8 = sld [smem:[#allocation0]]
  $region58: #{tpu_custom_call.1} parent=0
    _
  %s10 = ssub.s32 1, %s8
  %s11 = scalar_select 0, %s10, %s8
  $region1: #{tpu_custom_call.1} parent=0
    #allocation2 [shape = 'u8[65536]{0}', space=vmem, size = 0x10000, scoped, tag = 'input window, operand 0, single buffered']
    #allocation3 [shape = 's32[1]{0}', space=sflag, size = 0x4, scoped, tag = 'scoped memory for tpu_custom_call.1']
    #allocation4 [shape = 's32[1]{0}', space=sflag, size = 0x4, scoped, tag = 'scoped memory for tpu_custom_call.1']
    #allocation5 [shape = 'u8[1048576]{0}', space=vmem, size = 0x100000, scoped, tag = 'input window, operand 1, single buffered']
    #allocation6 [shape = 's32[1]{0}', space=sflag, size = 0x4, scoped, tag = 'scoped memory for tpu_custom_call.1']
    #allocation7 [shape = 'u8[2048]{0}', space=vmem, size = 0x800, scoped, tag = 'input window, operand 2, single buffered']
    #allocation8 [shape = 'u8[262144]{0}', space=vmem, size = 0x40000, scoped, tag = 'input window, operand 3, single buffered']
    #allocation9 [shape = 's32[1]{0}', space=sflag, size = 0x4, scoped, tag = 'scoped memory for tpu_custom_call.1']
    #allocation10 [shape = 'u8[65536]{0}', space=vmem, size = 0x10000, scoped, tag = 'input window, operand 5, single buffered']
    #allocation11 [shape = 'u8[4096]{0}', space=vmem, size = 0x1000, scoped, tag = 'output window, operand 0, single buffered']
    %12 = vsyncpa [#allocation3], 0
    %13 = vsyncpa [#allocation6], 0
    %14 = vsyncpa [#allocation9], 0
    %15 = vsyncpa [#allocation4], 0
    // Predicated region
    $region2: #{tpu_custom_call.1} parent=1 // pred_check
      _
    $region3: #{tpu_custom_call.1} parent=1 // pred_check_branch
      %17 = sbr.rel (0) target = $region5
    $region4: #{tpu_custom_call.1} parent=1 // pred_region
      %19 = vsyncadd [#allocation3], 0
      %s20 = sshll.u32 %s0, 4
      %s21 = int_to_ptr.hbm [resolvable:$true] %s20
      %s22 = sshll.u32 [#allocation2], 4
      %s23 = int_to_ptr.vmem [resolvable:$true] %s22
      %28 = dma.hbm_to_vmem [thread:$0]  %s21, 2048, %s23, [#allocation3], 1024, 1024, 64
    $region5: #{tpu_custom_call.1} parent=1 // pred_fallthru
      _
    // Predicated region
    $region6: #{tpu_custom_call.1} parent=1 // pred_check
      _
    $region7: #{tpu_custom_call.1} parent=1 // pred_check_branch
      %30 = sbr.rel (0) target = $region9
    $region8: #{tpu_custom_call.1} parent=1 // pred_region
      %32 = vsyncadd [#allocation6], 0
      %s33 = sshll.u32 %s1, 4
      %s34 = int_to_ptr.hbm [resolvable:$true] %s33
      %s35 = sshll.u32 [#allocation5], 4
      %s36 = int_to_ptr.vmem [resolvable:$true] %s35
      %41 = dma.hbm_to_vmem [thread:$0]  %s34, 32768, %s36, [#allocation6], 256, 256, 16
    $region9: #{tpu_custom_call.1} parent=1 // pred_fallthru
      _
    // Predicated region
    $region10: #{tpu_custom_call.1} parent=1 // pred_check
      _
    $region11: #{tpu_custom_call.1} parent=1 // pred_check_branch
      %43 = sbr.rel (0) target = $region13
    $region12: #{tpu_custom_call.1} parent=1 // pred_region
      %45 = vsyncadd [#allocation6], 0
      %s47 = sshll.u32 %s2, 4
      %s48 = int_to_ptr.hbm [resolvable:$true] %s47
      %s49 = sshll.u32 [#allocation7], 4
      %s50 = int_to_ptr.vmem [resolvable:$true] %s49
      %52 = dma.hbm_to_vmem [thread:$0]  %s48, 64, %s50, [#allocation6]
    $region13: #{tpu_custom_call.1} parent=1 // pred_fallthru
      _
    // Predicated region
    $region14: #{tpu_custom_call.1} parent=1 // pred_check
      _
    $region15: #{tpu_custom_call.1} parent=1 // pred_check_branch
      %54 = sbr.rel (0) target = $region17
    $region16: #{tpu_custom_call.1} parent=1 // pred_region
      %56 = vsyncadd [#allocation9], 0
      %s57 = sshll.u32 %s3, 4
      %s58 = int_to_ptr.hbm [resolvable:$true] %s57
      %s59 = sshll.u32 [#allocation8], 4
      %s60 = int_to_ptr.vmem [resolvable:$true] %s59
      %65 = dma.hbm_to_vmem [thread:$0]  %s58, 8192, %s60, [#allocation9], 128, 128, 8
    $region17: #{tpu_custom_call.1} parent=1 // pred_fallthru
      _
    // Predicated region
    $region18: #{tpu_custom_call.1} parent=1 // pred_check
      _
    $region19: #{tpu_custom_call.1} parent=1 // pred_check_branch
      %67 = sbr.rel (0) target = $region21
    $region20: #{tpu_custom_call.1} parent=1 // pred_region
      _
    $region21: #{tpu_custom_call.1} parent=1 // pred_fallthru
      _
    // Predicated region
    $region22: #{tpu_custom_call.1} parent=1 // pred_check
      _
    $region23: #{tpu_custom_call.1} parent=1 // pred_check_branch
      %69 = sbr.rel (0) target = $region25
    $region24: #{tpu_custom_call.1} parent=1 // pred_region
      %71 = vsyncadd [#allocation9], 0
      %s72 = sshll.u32 %s5, 4
      %s73 = int_to_ptr.hbm [resolvable:$true] %s72
      %s74 = sshll.u32 [#allocation10], 4
      %s75 = int_to_ptr.vmem [resolvable:$true] %s74
      %80 = dma.hbm_to_vmem [thread:$0]  %s73, 2048, %s75, [#allocation9], 64, 64, 4
    $region25: #{tpu_custom_call.1} parent=1 // pred_fallthru
      _
    // Predicated region
    $region26: #{tpu_custom_call.1} parent=1 // pred_check
      _
    $region27: #{tpu_custom_call.1} parent=1 // pred_check_branch
      %82 = sbr.rel (0) target = $region29
    $region28: #{tpu_custom_call.1} parent=1 // pred_region
      _
    $region29: #{tpu_custom_call.1} parent=1 // pred_fallthru
      _
    // Predicated region
    $region30: #{tpu_custom_call.1} parent=1 // pred_check
      _
    $region31: #{tpu_custom_call.1} parent=1 // pred_check_branch
      %84 = sbr.rel (0) target = $region33
    $region32: #{tpu_custom_call.1} parent=1 // pred_region
      %86 = dma.done [#allocation3], 2048
    $region33: #{tpu_custom_call.1} parent=1 // pred_fallthru
      _
    // Predicated region
    $region34: #{tpu_custom_call.1} parent=1 // pred_check
      _
    $region35: #{tpu_custom_call.1} parent=1 // pred_check_branch
      %88 = sbr.rel (0) target = $region37
    $region36: #{tpu_custom_call.1} parent=1 // pred_region
      %90 = dma.done [#allocation6], 32768
    $region37: #{tpu_custom_call.1} parent=1 // pred_fallthru
      _
    // Predicated region
    $region38: #{tpu_custom_call.1} parent=1 // pred_check
      _
    $region39: #{tpu_custom_call.1} parent=1 // pred_check_branch
      %92 = sbr.rel (0) target = $region41
    $region40: #{tpu_custom_call.1} parent=1 // pred_region
      %94 = dma.done [#allocation6], 64
    $region41: #{tpu_custom_call.1} parent=1 // pred_fallthru
      _
    // Predicated region
    $region42: #{tpu_custom_call.1} parent=1 // pred_check
      _
    $region43: #{tpu_custom_call.1} parent=1 // pred_check_branch
      %96 = sbr.rel (0) target = $region45
    $region44: #{tpu_custom_call.1} parent=1 // pred_region
      %98 = dma.done [#allocation9], 8192
    $region45: #{tpu_custom_call.1} parent=1 // pred_fallthru
      _
    // Predicated region
    $region46: #{tpu_custom_call.1} parent=1 // pred_check
      _
    $region47: #{tpu_custom_call.1} parent=1 // pred_check_branch
      %100 = sbr.rel (0) target = $region49
    $region48: #{tpu_custom_call.1} parent=1 // pred_region
      %102 = dma.done [#allocation9], 2048
    $region49: #{tpu_custom_call.1} parent=1 // pred_fallthru
      _
    %v103 = vld [vmem:[#allocation2] sm:$0xff]
    %v104 = vld [vmem:[#allocation2 + $0x8] sm:$0xff]
    %v105 = vld [vmem:[#allocation2 + $0x10] sm:$0xff]
    %v106 = vld [vmem:[#allocation2 + $0x18] sm:$0xff]
    %v107 = vld [vmem:[#allocation2 + $0x20] sm:$0xff]
    %v108 = vld [vmem:[#allocation2 + $0x28] sm:$0xff]
    %v109 = vld [vmem:[#allocation2 + $0x30] sm:$0xff]
    %v110 = vld [vmem:[#allocation2 + $0x38] sm:$0xff]
    %v111 = vld [vmem:[#allocation2 + $0x40] sm:$0xff]
    %v112 = vld [vmem:[#allocation2 + $0x48] sm:$0xff]
    %v113 = vld [vmem:[#allocation2 + $0x50] sm:$0xff]
    %v114 = vld [vmem:[#allocation2 + $0x58] sm:$0xff]
    %v115 = vld [vmem:[#allocation2 + $0x60] sm:$0xff]
    %v116 = vld [vmem:[#allocation2 + $0x68] sm:$0xff]
    %v117 = vld [vmem:[#allocation2 + $0x70] sm:$0xff]
    %v118 = vld [vmem:[#allocation2 + $0x78] sm:$0xff]
    %v119 = vpack.c.bf16 %v111, %v103
    %v120 = vpack.c.bf16 %v112, %v104
    %v121 = vpack.c.bf16 %v113, %v105
    %v122 = vpack.c.bf16 %v114, %v106
    %v123 = vpack.c.bf16 %v115, %v107
    %v124 = vpack.c.bf16 %v116, %v108
    %v125 = vpack.c.bf16 %v117, %v109
    %v126 = vpack.c.bf16 %v118, %v110
    %v127 = vld [vmem:[#allocation5] sm:$0xff]
    %v128 = vld [vmem:[#allocation5 + $0x8] sm:$0xff]
    %v129 = vld [vmem:[#allocation5 + $0x10] sm:$0xff]
    %v130 = vld [vmem:[#allocation5 + $0x18] sm:$0xff]
    %v131 = vld [vmem:[#allocation5 + $0x20] sm:$0xff]
    %v132 = vld [vmem:[#allocation5 + $0x28] sm:$0xff]
    %v133 = vld [vmem:[#allocation5 + $0x30] sm:$0xff]
    %v134 = vld [vmem:[#allocation5 + $0x38] sm:$0xff]
    %v135 = vld [vmem:[#allocation5 + $0x40] sm:$0xff]
    %v136 = vld [vmem:[#allocation5 + $0x48] sm:$0xff]
    %v137 = vld [vmem:[#allocation5 + $0x50] sm:$0xff]
    %v138 = vld [vmem:[#allocation5 + $0x58] sm:$0xff]
    %v139 = vld [vmem:[#allocation5 + $0x60] sm:$0xff]
    %v140 = vld [vmem:[#allocation5 + $0x68] sm:$0xff]
    %v141 = vld [vmem:[#allocation5 + $0x70] sm:$0xff]
    %v142 = vld [vmem:[#allocation5 + $0x78] sm:$0xff]
    %v143 = vld [vmem:[#allocation5 + $0x80] sm:$0xff]
    %v144 = vld [vmem:[#allocation5 + $0x88] sm:$0xff]
    %v145 = vld [vmem:[#allocation5 + $0x90] sm:$0xff]
    %v146 = vld [vmem:[#allocation5 + $0x98] sm:$0xff]
    %v147 = vld [vmem:[#allocation5 + $0xa0] sm:$0xff]
    %v148 = vld [vmem:[#allocation5 + $0xa8] sm:$0xff]
    %v149 = vld [vmem:[#allocation5 + $0xb0] sm:$0xff]
    %v150 = vld [vmem:[#allocation5 + $0xb8] sm:$0xff]
    %v151 = vld [vmem:[#allocation5 + $0xc0] sm:$0xff]
    %v152 = vld [vmem:[#allocation5 + $0xc8] sm:$0xff]
    %v153 = vld [vmem:[#allocation5 + $0xd0] sm:$0xff]
    %v154 = vld [vmem:[#allocation5 + $0xd8] sm:$0xff]
    %v155 = vld [vmem:[#allocation5 + $0xe0] sm:$0xff]
    %v156 = vld [vmem:[#allocation5 + $0xe8] sm:$0xff]
    %v157 = vld [vmem:[#allocation5 + $0xf0] sm:$0xff]
    %v158 = vld [vmem:[#allocation5 + $0xf8] sm:$0xff]
    %v159 = vld [vmem:[#allocation5 + $0x100] sm:$0xff]
    %v160 = vld [vmem:[#allocation5 + $0x108] sm:$0xff]
    %v161 = vld [vmem:[#allocation5 + $0x110] sm:$0xff]
    %v162 = vld [vmem:[#allocation5 + $0x118] sm:$0xff]
    %v163 = vld [vmem:[#allocation5 + $0x120] sm:$0xff]
    %v164 = vld [vmem:[#allocation5 + $0x128] sm:$0xff]
    %v165 = vld [vmem:[#allocation5 + $0x130] sm:$0xff]
    %v166 = vld [vmem:[#allocation5 + $0x138] sm:$0xff]
    %v167 = vld [vmem:[#allocation5 + $0x140] sm:$0xff]
    %v168 = vld [vmem:[#allocation5 + $0x148] sm:$0xff]
    %v169 = vld [vmem:[#allocation5 + $0x150] sm:$0xff]
    %v170 = vld [vmem:[#allocation5 + $0x158] sm:$0xff]
    %v171 = vld [vmem:[#allocation5 + $0x160] sm:$0xff]
    %v172 = vld [vmem:[#allocation5 + $0x168] sm:$0xff]
    %v173 = vld [vmem:[#allocation5 + $0x170] sm:$0xff]
    %v174 = vld [vmem:[#allocation5 + $0x178] sm:$0xff]
    %v175 = vld [vmem:[#allocation5 + $0x180] sm:$0xff]
    %v176 = vld [vmem:[#allocation5 + $0x188] sm:$0xff]
    %v177 = vld [vmem:[#allocation5 + $0x190] sm:$0xff]
    %v178 = vld [vmem:[#allocation5 + $0x198] sm:$0xff]
    %v179 = vld [vmem:[#allocation5 + $0x1a0] sm:$0xff]
    %v180 = vld [vmem:[#allocation5 + $0x1a8] sm:$0xff]
    %v181 = vld [vmem:[#allocation5 + $0x1b0] sm:$0xff]
    %v182 = vld [vmem:[#allocation5 + $0x1b8] sm:$0xff]
    %v183 = vld [vmem:[#allocation5 + $0x1c0] sm:$0xff]
    %v184 = vld [vmem:[#allocation5 + $0x1c8] sm:$0xff]
    %v185 = vld [vmem:[#allocation5 + $0x1d0] sm:$0xff]
    %v186 = vld [vmem:[#allocation5 + $0x1d8] sm:$0xff]
    %v187 = vld [vmem:[#allocation5 + $0x1e0] sm:$0xff]
    %v188 = vld [vmem:[#allocation5 + $0x1e8] sm:$0xff]
    %v189 = vld [vmem:[#allocation5 + $0x1f0] sm:$0xff]
    %v190 = vld [vmem:[#allocation5 + $0x1f8] sm:$0xff]
    %v191 = vld [vmem:[#allocation5 + $0x200] sm:$0xff]
    %v192 = vld [vmem:[#allocation5 + $0x208] sm:$0xff]
    %v193 = vld [vmem:[#allocation5 + $0x210] sm:$0xff]
    %v194 = vld [vmem:[#allocation5 + $0x218] sm:$0xff]
    %v195 = vld [vmem:[#allocation5 + $0x220] sm:$0xff]
    %v196 = vld [vmem:[#allocation5 + $0x228] sm:$0xff]
    %v197 = vld [vmem:[#allocation5 + $0x230] sm:$0xff]
    %v198 = vld [vmem:[#allocation5 + $0x238] sm:$0xff]
    %v199 = vld [vmem:[#allocation5 + $0x240] sm:$0xff]
    %v200 = vld [vmem:[#allocation5 + $0x248] sm:$0xff]
    %v201 = vld [vmem:[#allocation5 + $0x250] sm:$0xff]
    %v202 = vld [vmem:[#allocation5 + $0x258] sm:$0xff]
    %v203 = vld [vmem:[#allocation5 + $0x260] sm:$0xff]
    %v204 = vld [vmem:[#allocation5 + $0x268] sm:$0xff]
    %v205 = vld [vmem:[#allocation5 + $0x270] sm:$0xff]
    %v206 = vld [vmem:[#allocation5 + $0x278] sm:$0xff]
    %v207 = vld [vmem:[#allocation5 + $0x280] sm:$0xff]
    %v208 = vld [vmem:[#allocation5 + $0x288] sm:$0xff]
    %v209 = vld [vmem:[#allocation5 + $0x290] sm:$0xff]
    %v210 = vld [vmem:[#allocation5 + $0x298] sm:$0xff]
    %v211 = vld [vmem:[#allocation5 + $0x2a0] sm:$0xff]
    %v212 = vld [vmem:[#allocation5 + $0x2a8] sm:$0xff]
    %v213 = vld [vmem:[#allocation5 + $0x2b0] sm:$0xff]
    %v214 = vld [vmem:[#allocation5 + $0x2b8] sm:$0xff]
    %v215 = vld [vmem:[#allocation5 + $0x2c0] sm:$0xff]
    %v216 = vld [vmem:[#allocation5 + $0x2c8] sm:$0xff]
    %v217 = vld [vmem:[#allocation5 + $0x2d0] sm:$0xff]
    %v218 = vld [vmem:[#allocation5 + $0x2d8] sm:$0xff]
    %v219 = vld [vmem:[#allocation5 + $0x2e0] sm:$0xff]
    %v220 = vld [vmem:[#allocation5 + $0x2e8] sm:$0xff]
    %v221 = vld [vmem:[#allocation5 + $0x2f0] sm:$0xff]
    %v222 = vld [vmem:[#allocation5 + $0x2f8] sm:$0xff]
    %v223 = vld [vmem:[#allocation5 + $0x300] sm:$0xff]
    %v224 = vld [vmem:[#allocation5 + $0x308] sm:$0xff]
    %v225 = vld [vmem:[#allocation5 + $0x310] sm:$0xff]
    %v226 = vld [vmem:[#allocation5 + $0x318] sm:$0xff]
    %v227 = vld [vmem:[#allocation5 + $0x320] sm:$0xff]
    %v228 = vld [vmem:[#allocation5 + $0x328] sm:$0xff]
    %v229 = vld [vmem:[#allocation5 + $0x330] sm:$0xff]
    %v230 = vld [vmem:[#allocation5 + $0x338] sm:$0xff]
    %v231 = vld [vmem:[#allocation5 + $0x340] sm:$0xff]
    %v232 = vld [vmem:[#allocation5 + $0x348] sm:$0xff]
    %v233 = vld [vmem:[#allocation5 + $0x350] sm:$0xff]
    %v234 = vld [vmem:[#allocation5 + $0x358] sm:$0xff]
    %v235 = vld [vmem:[#allocation5 + $0x360] sm:$0xff]
    %v236 = vld [vmem:[#allocation5 + $0x368] sm:$0xff]
    %v237 = vld [vmem:[#allocation5 + $0x370] sm:$0xff]
    %v238 = vld [vmem:[#allocation5 + $0x378] sm:$0xff]
    %v239 = vld [vmem:[#allocation5 + $0x380] sm:$0xff]
    %v240 = vld [vmem:[#allocation5 + $0x388] sm:$0xff]
    %v241 = vld [vmem:[#allocation5 + $0x390] sm:$0xff]
    %v242 = vld [vmem:[#allocation5 + $0x398] sm:$0xff]
    %v243 = vld [vmem:[#allocation5 + $0x3a0] sm:$0xff]
    %v244 = vld [vmem:[#allocation5 + $0x3a8] sm:$0xff]
    %v245 = vld [vmem:[#allocation5 + $0x3b0] sm:$0xff]
    %v246 = vld [vmem:[#allocation5 + $0x3b8] sm:$0xff]
    %v247 = vld [vmem:[#allocation5 + $0x3c0] sm:$0xff]
    %v248 = vld [vmem:[#allocation5 + $0x3c8] sm:$0xff]
    %v249 = vld [vmem:[#allocation5 + $0x3d0] sm:$0xff]
    %v250 = vld [vmem:[#allocation5 + $0x3d8] sm:$0xff]
    %v251 = vld [vmem:[#allocation5 + $0x3e0] sm:$0xff]
    %v252 = vld [vmem:[#allocation5 + $0x3e8] sm:$0xff]
    %v253 = vld [vmem:[#allocation5 + $0x3f0] sm:$0xff]
    %v254 = vld [vmem:[#allocation5 + $0x3f8] sm:$0xff]
    %v255 = vld [vmem:[#allocation5 + $0x400] sm:$0xff]
    %v256 = vld [vmem:[#allocation5 + $0x408] sm:$0xff]
    %v257 = vld [vmem:[#allocation5 + $0x410] sm:$0xff]
    %v258 = vld [vmem:[#allocation5 + $0x418] sm:$0xff]
    %v259 = vld [vmem:[#allocation5 + $0x420] sm:$0xff]
    %v260 = vld [vmem:[#allocation5 + $0x428] sm:$0xff]
    %v261 = vld [vmem:[#allocation5 + $0x430] sm:$0xff]
    %v262 = vld [vmem:[#allocation5 + $0x438] sm:$0xff]
    %v263 = vld [vmem:[#allocation5 + $0x440] sm:$0xff]
    %v264 = vld [vmem:[#allocation5 + $0x448] sm:$0xff]
    %v265 = vld [vmem:[#allocation5 + $0x450] sm:$0xff]
    %v266 = vld [vmem:[#allocation5 + $0x458] sm:$0xff]
    %v267 = vld [vmem:[#allocation5 + $0x460] sm:$0xff]
    %v268 = vld [vmem:[#allocation5 + $0x468] sm:$0xff]
    %v269 = vld [vmem:[#allocation5 + $0x470] sm:$0xff]
    %v270 = vld [vmem:[#allocation5 + $0x478] sm:$0xff]
    %v271 = vld [vmem:[#allocation5 + $0x480] sm:$0xff]
    %v272 = vld [vmem:[#allocation5 + $0x488] sm:$0xff]
    %v273 = vld [vmem:[#allocation5 + $0x490] sm:$0xff]
    %v274 = vld [vmem:[#allocation5 + $0x498] sm:$0xff]
    %v275 = vld [vmem:[#allocation5 + $0x4a0] sm:$0xff]
    %v276 = vld [vmem:[#allocation5 + $0x4a8] sm:$0xff]
    %v277 = vld [vmem:[#allocation5 + $0x4b0] sm:$0xff]
    %v278 = vld [vmem:[#allocation5 + $0x4b8] sm:$0xff]
    %v279 = vld [vmem:[#allocation5 + $0x4c0] sm:$0xff]
    %v280 = vld [vmem:[#allocation5 + $0x4c8] sm:$0xff]
    %v281 = vld [vmem:[#allocation5 + $0x4d0] sm:$0xff]
    %v282 = vld [vmem:[#allocation5 + $0x4d8] sm:$0xff]
    %v283 = vld [vmem:[#allocation5 + $0x4e0] sm:$0xff]
    %v284 = vld [vmem:[#allocation5 + $0x4e8] sm:$0xff]
    %v285 = vld [vmem:[#allocation5 + $0x4f0] sm:$0xff]
    %v286 = vld [vmem:[#allocation5 + $0x4f8] sm:$0xff]
    %v287 = vld [vmem:[#allocation5 + $0x500] sm:$0xff]
    %v288 = vld [vmem:[#allocation5 + $0x508] sm:$0xff]
    %v289 = vld [vmem:[#allocation5 + $0x510] sm:$0xff]
    %v290 = vld [vmem:[#allocation5 + $0x518] sm:$0xff]
    %v291 = vld [vmem:[#allocation5 + $0x520] sm:$0xff]
    %v292 = vld [vmem:[#allocation5 + $0x528] sm:$0xff]
    %v293 = vld [vmem:[#allocation5 + $0x530] sm:$0xff]
    %v294 = vld [vmem:[#allocation5 + $0x538] sm:$0xff]
    %v295 = vld [vmem:[#allocation5 + $0x540] sm:$0xff]
    %v296 = vld [vmem:[#allocation5 + $0x548] sm:$0xff]
    %v297 = vld [vmem:[#allocation5 + $0x550] sm:$0xff]
    %v298 = vld [vmem:[#allocation5 + $0x558] sm:$0xff]
    %v299 = vld [vmem:[#allocation5 + $0x560] sm:$0xff]
    %v300 = vld [vmem:[#allocation5 + $0x568] sm:$0xff]
    %v301 = vld [vmem:[#allocation5 + $0x570] sm:$0xff]
    %v302 = vld [vmem:[#allocation5 + $0x578] sm:$0xff]
    %v303 = vld [vmem:[#allocation5 + $0x580] sm:$0xff]
    %v304 = vld [vmem:[#allocation5 + $0x588] sm:$0xff]
    %v305 = vld [vmem:[#allocation5 + $0x590] sm:$0xff]
    %v306 = vld [vmem:[#allocation5 + $0x598] sm:$0xff]
    %v307 = vld [vmem:[#allocation5 + $0x5a0] sm:$0xff]
    %v308 = vld [vmem:[#allocation5 + $0x5a8] sm:$0xff]
    %v309 = vld [vmem:[#allocation5 + $0x5b0] sm:$0xff]
    %v310 = vld [vmem:[#allocation5 + $0x5b8] sm:$0xff]
    %v311 = vld [vmem:[#allocation5 + $0x5c0] sm:$0xff]
    %v312 = vld [vmem:[#allocation5 + $0x5c8] sm:$0xff]
    %v313 = vld [vmem:[#allocation5 + $0x5d0] sm:$0xff]
    %v314 = vld [vmem:[#allocation5 + $0x5d8] sm:$0xff]
    %v315 = vld [vmem:[#allocation5 + $0x5e0] sm:$0xff]
    %v316 = vld [vmem:[#allocation5 + $0x5e8] sm:$0xff]
    %v317 = vld [vmem:[#allocation5 + $0x5f0] sm:$0xff]
    %v318 = vld [vmem:[#allocation5 + $0x5f8] sm:$0xff]
    %v319 = vld [vmem:[#allocation5 + $0x600] sm:$0xff]
    %v320 = vld [vmem:[#allocation5 + $0x608] sm:$0xff]
    %v321 = vld [vmem:[#allocation5 + $0x610] sm:$0xff]
    %v322 = vld [vmem:[#allocation5 + $0x618] sm:$0xff]
    %v323 = vld [vmem:[#allocation5 + $0x620] sm:$0xff]
    %v324 = vld [vmem:[#allocation5 + $0x628] sm:$0xff]
    %v325 = vld [vmem:[#allocation5 + $0x630] sm:$0xff]
    %v326 = vld [vmem:[#allocation5 + $0x638] sm:$0xff]
    %v327 = vld [vmem:[#allocation5 + $0x640] sm:$0xff]
    %v328 = vld [vmem:[#allocation5 + $0x648] sm:$0xff]
    %v329 = vld [vmem:[#allocation5 + $0x650] sm:$0xff]
    %v330 = vld [vmem:[#allocation5 + $0x658] sm:$0xff]
    %v331 = vld [vmem:[#allocation5 + $0x660] sm:$0xff]
    %v332 = vld [vmem:[#allocation5 + $0x668] sm:$0xff]
    %v333 = vld [vmem:[#allocation5 + $0x670] sm:$0xff]
    %v334 = vld [vmem:[#allocation5 + $0x678] sm:$0xff]
    %v335 = vld [vmem:[#allocation5 + $0x680] sm:$0xff]
    %v336 = vld [vmem:[#allocation5 + $0x688] sm:$0xff]
    %v337 = vld [vmem:[#allocation5 + $0x690] sm:$0xff]
    %v338 = vld [vmem:[#allocation5 + $0x698] sm:$0xff]
    %v339 = vld [vmem:[#allocation5 + $0x6a0] sm:$0xff]
    %v340 = vld [vmem:[#allocation5 + $0x6a8] sm:$0xff]
    %v341 = vld [vmem:[#allocation5 + $0x6b0] sm:$0xff]
    %v342 = vld [vmem:[#allocation5 + $0x6b8] sm:$0xff]
    %v343 = vld [vmem:[#allocation5 + $0x6c0] sm:$0xff]
    %v344 = vld [vmem:[#allocation5 + $0x6c8] sm:$0xff]
    %v345 = vld [vmem:[#allocation5 + $0x6d0] sm:$0xff]
    %v346 = vld [vmem:[#allocation5 + $0x6d8] sm:$0xff]
    %v347 = vld [vmem:[#allocation5 + $0x6e0] sm:$0xff]
    %v348 = vld [vmem:[#allocation5 + $0x6e8] sm:$0xff]
    %v349 = vld [vmem:[#allocation5 + $0x6f0] sm:$0xff]
    %v350 = vld [vmem:[#allocation5 + $0x6f8] sm:$0xff]
    %v351 = vld [vmem:[#allocation5 + $0x700] sm:$0xff]
    %v352 = vld [vmem:[#allocation5 + $0x708] sm:$0xff]
    %v353 = vld [vmem:[#allocation5 + $0x710] sm:$0xff]
    %v354 = vld [vmem:[#allocation5 + $0x718] sm:$0xff]
    %v355 = vld [vmem:[#allocation5 + $0x720] sm:$0xff]
    %v356 = vld [vmem:[#allocation5 + $0x728] sm:$0xff]
    %v357 = vld [vmem:[#allocation5 + $0x730] sm:$0xff]
    %v358 = vld [vmem:[#allocation5 + $0x738] sm:$0xff]
    %v359 = vld [vmem:[#allocation5 + $0x740] sm:$0xff]
    %v360 = vld [vmem:[#allocation5 + $0x748] sm:$0xff]
    %v361 = vld [vmem:[#allocation5 + $0x750] sm:$0xff]
    %v362 = vld [vmem:[#allocation5 + $0x758] sm:$0xff]
    %v363 = vld [vmem:[#allocation5 + $0x760] sm:$0xff]
    %v364 = vld [vmem:[#allocation5 + $0x768] sm:$0xff]
    %v365 = vld [vmem:[#allocation5 + $0x770] sm:$0xff]
    %v366 = vld [vmem:[#allocation5 + $0x778] sm:$0xff]
    %v367 = vld [vmem:[#allocation5 + $0x780] sm:$0xff]
    %v368 = vld [vmem:[#allocation5 + $0x788] sm:$0xff]
    %v369 = vld [vmem:[#allocation5 + $0x790] sm:$0xff]
    %v370 = vld [vmem:[#allocation5 + $0x798] sm:$0xff]
    %v371 = vld [vmem:[#allocation5 + $0x7a0] sm:$0xff]
    %v372 = vld [vmem:[#allocation5 + $0x7a8] sm:$0xff]
    %v373 = vld [vmem:[#allocation5 + $0x7b0] sm:$0xff]
    %v374 = vld [vmem:[#allocation5 + $0x7b8] sm:$0xff]
    %v375 = vld [vmem:[#allocation5 + $0x7c0] sm:$0xff]
    %v376 = vld [vmem:[#allocation5 + $0x7c8] sm:$0xff]
    %v377 = vld [vmem:[#allocation5 + $0x7d0] sm:$0xff]
    %v378 = vld [vmem:[#allocation5 + $0x7d8] sm:$0xff]
    %v379 = vld [vmem:[#allocation5 + $0x7e0] sm:$0xff]
    %v380 = vld [vmem:[#allocation5 + $0x7e8] sm:$0xff]
    %v381 = vld [vmem:[#allocation5 + $0x7f0] sm:$0xff]
    %v382 = vld [vmem:[#allocation5 + $0x7f8] sm:$0xff]
    %v383 = vld [vmem:[#allocation7] sm:$0xf]
    %v385 = vperm.slane %v383, 0
    %v386 = vperm.slane %v383, 1
    %v387 = vperm.slane %v383, 2
    %v388 = vperm.slane %v383, 3
    %v649 = vunpack.c.l.b16 %v127
    %v650 = vunpack.c.h.b16 %v127
    %v651 = vunpack.c.l.b16 %v128
    %v652 = vunpack.c.h.b16 %v128
    %v653 = vunpack.c.l.b16 %v129
    %v654 = vunpack.c.h.b16 %v129
    %v655 = vunpack.c.l.b16 %v130
    %v656 = vunpack.c.h.b16 %v130
    %v657 = vunpack.c.l.b16 %v131
    %v658 = vunpack.c.h.b16 %v131
    %v659 = vunpack.c.l.b16 %v132
    %v660 = vunpack.c.h.b16 %v132
    %v661 = vunpack.c.l.b16 %v133
    %v662 = vunpack.c.h.b16 %v133
    %v663 = vunpack.c.l.b16 %v134
    %v664 = vunpack.c.h.b16 %v134
    %v665 = vunpack.c.l.b16 %v135
    %v666 = vunpack.c.h.b16 %v135
    %v667 = vunpack.c.l.b16 %v136
    %v668 = vunpack.c.h.b16 %v136
    %v669 = vunpack.c.l.b16 %v137
    %v670 = vunpack.c.h.b16 %v137
    %v671 = vunpack.c.l.b16 %v138
    %v672 = vunpack.c.h.b16 %v138
    %v673 = vunpack.c.l.b16 %v139
    %v674 = vunpack.c.h.b16 %v139
    %v675 = vunpack.c.l.b16 %v140
    %v676 = vunpack.c.h.b16 %v140
    %v677 = vunpack.c.l.b16 %v141
    %v678 = vunpack.c.h.b16 %v141
    %v679 = vunpack.c.l.b16 %v142
    %v680 = vunpack.c.h.b16 %v142
    %v681 = vunpack.c.l.b16 %v143
    %v682 = vunpack.c.h.b16 %v143
    %v683 = vunpack.c.l.b16 %v144
    %v684 = vunpack.c.h.b16 %v144
    %v685 = vunpack.c.l.b16 %v145
    %v686 = vunpack.c.h.b16 %v145
    %v687 = vunpack.c.l.b16 %v146
    %v688 = vunpack.c.h.b16 %v146
    %v689 = vunpack.c.l.b16 %v147
    %v690 = vunpack.c.h.b16 %v147
    %v691 = vunpack.c.l.b16 %v148
    %v692 = vunpack.c.h.b16 %v148
    %v693 = vunpack.c.l.b16 %v149
    %v694 = vunpack.c.h.b16 %v149
    %v695 = vunpack.c.l.b16 %v150
    %v696 = vunpack.c.h.b16 %v150
    %v697 = vunpack.c.l.b16 %v151
    %v698 = vunpack.c.h.b16 %v151
    %v699 = vunpack.c.l.b16 %v152
    %v700 = vunpack.c.h.b16 %v152
    %v701 = vunpack.c.l.b16 %v153
    %v702 = vunpack.c.h.b16 %v153
    %v703 = vunpack.c.l.b16 %v154
    %v704 = vunpack.c.h.b16 %v154
    %v705 = vunpack.c.l.b16 %v155
    %v706 = vunpack.c.h.b16 %v155
    %v707 = vunpack.c.l.b16 %v156
    %v708 = vunpack.c.h.b16 %v156
    %v709 = vunpack.c.l.b16 %v157
    %v710 = vunpack.c.h.b16 %v157
    %v711 = vunpack.c.l.b16 %v158
    %v712 = vunpack.c.h.b16 %v158
    %v713 = vunpack.c.l.b16 %v159
    %v714 = vunpack.c.h.b16 %v159
    %v715 = vunpack.c.l.b16 %v160
    %v716 = vunpack.c.h.b16 %v160
    %v717 = vunpack.c.l.b16 %v161
    %v718 = vunpack.c.h.b16 %v161
    %v719 = vunpack.c.l.b16 %v162
    %v720 = vunpack.c.h.b16 %v162
    %v721 = vunpack.c.l.b16 %v163
    %v722 = vunpack.c.h.b16 %v163
    %v723 = vunpack.c.l.b16 %v164
    %v724 = vunpack.c.h.b16 %v164
    %v725 = vunpack.c.l.b16 %v165
    %v726 = vunpack.c.h.b16 %v165
    %v727 = vunpack.c.l.b16 %v166
    %v728 = vunpack.c.h.b16 %v166
    %v729 = vunpack.c.l.b16 %v167
    %v730 = vunpack.c.h.b16 %v167
    %v731 = vunpack.c.l.b16 %v168
    %v732 = vunpack.c.h.b16 %v168
    %v733 = vunpack.c.l.b16 %v169
    %v734 = vunpack.c.h.b16 %v169
    %v735 = vunpack.c.l.b16 %v170
    %v736 = vunpack.c.h.b16 %v170
    %v737 = vunpack.c.l.b16 %v171
    %v738 = vunpack.c.h.b16 %v171
    %v739 = vunpack.c.l.b16 %v172
    %v740 = vunpack.c.h.b16 %v172
    %v741 = vunpack.c.l.b16 %v173
    %v742 = vunpack.c.h.b16 %v173
    %v743 = vunpack.c.l.b16 %v174
    %v744 = vunpack.c.h.b16 %v174
    %v745 = vunpack.c.l.b16 %v175
    %v746 = vunpack.c.h.b16 %v175
    %v747 = vunpack.c.l.b16 %v176
    %v748 = vunpack.c.h.b16 %v176
    %v749 = vunpack.c.l.b16 %v177
    %v750 = vunpack.c.h.b16 %v177
    %v751 = vunpack.c.l.b16 %v178
    %v752 = vunpack.c.h.b16 %v178
    %v753 = vunpack.c.l.b16 %v179
    %v754 = vunpack.c.h.b16 %v179
    %v755 = vunpack.c.l.b16 %v180
    %v756 = vunpack.c.h.b16 %v180
    %v757 = vunpack.c.l.b16 %v181
    %v758 = vunpack.c.h.b16 %v181
    %v759 = vunpack.c.l.b16 %v182
    %v760 = vunpack.c.h.b16 %v182
    %v761 = vunpack.c.l.b16 %v183
    %v762 = vunpack.c.h.b16 %v183
    %v763 = vunpack.c.l.b16 %v184
    %v764 = vunpack.c.h.b16 %v184
    %v765 = vunpack.c.l.b16 %v185
    %v766 = vunpack.c.h.b16 %v185
    %v767 = vunpack.c.l.b16 %v186
    %v768 = vunpack.c.h.b16 %v186
    %v769 = vunpack.c.l.b16 %v187
    %v770 = vunpack.c.h.b16 %v187
    %v771 = vunpack.c.l.b16 %v188
    %v772 = vunpack.c.h.b16 %v188
    %v773 = vunpack.c.l.b16 %v189
    %v774 = vunpack.c.h.b16 %v189
    %v775 = vunpack.c.l.b16 %v190
    %v776 = vunpack.c.h.b16 %v190
    %v777 = vunpack.c.l.b16 %v191
    %v778 = vunpack.c.h.b16 %v191
    %v779 = vunpack.c.l.b16 %v192
    %v780 = vunpack.c.h.b16 %v192
    %v781 = vunpack.c.l.b16 %v193
    %v782 = vunpack.c.h.b16 %v193
    %v783 = vunpack.c.l.b16 %v194
    %v784 = vunpack.c.h.b16 %v194
    %v785 = vunpack.c.l.b16 %v195
    %v786 = vunpack.c.h.b16 %v195
    %v787 = vunpack.c.l.b16 %v196
    %v788 = vunpack.c.h.b16 %v196
    %v789 = vunpack.c.l.b16 %v197
    %v790 = vunpack.c.h.b16 %v197
    %v791 = vunpack.c.l.b16 %v198
    %v792 = vunpack.c.h.b16 %v198
    %v793 = vunpack.c.l.b16 %v199
    %v794 = vunpack.c.h.b16 %v199
    %v795 = vunpack.c.l.b16 %v200
    %v796 = vunpack.c.h.b16 %v200
    %v797 = vunpack.c.l.b16 %v201
    %v798 = vunpack.c.h.b16 %v201
    %v799 = vunpack.c.l.b16 %v202
    %v800 = vunpack.c.h.b16 %v202
    %v801 = vunpack.c.l.b16 %v203
    %v802 = vunpack.c.h.b16 %v203
    %v803 = vunpack.c.l.b16 %v204
    %v804 = vunpack.c.h.b16 %v204
    %v805 = vunpack.c.l.b16 %v205
    %v806 = vunpack.c.h.b16 %v205
    %v807 = vunpack.c.l.b16 %v206
    %v808 = vunpack.c.h.b16 %v206
    %v809 = vunpack.c.l.b16 %v207
    %v810 = vunpack.c.h.b16 %v207
    %v811 = vunpack.c.l.b16 %v208
    %v812 = vunpack.c.h.b16 %v208
    %v813 = vunpack.c.l.b16 %v209
    %v814 = vunpack.c.h.b16 %v209
    %v815 = vunpack.c.l.b16 %v210
    %v816 = vunpack.c.h.b16 %v210
    %v817 = vunpack.c.l.b16 %v211
    %v818 = vunpack.c.h.b16 %v211
    %v819 = vunpack.c.l.b16 %v212
    %v820 = vunpack.c.h.b16 %v212
    %v821 = vunpack.c.l.b16 %v213
    %v822 = vunpack.c.h.b16 %v213
    %v823 = vunpack.c.l.b16 %v214
    %v824 = vunpack.c.h.b16 %v214
    %v825 = vunpack.c.l.b16 %v215
    %v826 = vunpack.c.h.b16 %v215
    %v827 = vunpack.c.l.b16 %v216
    %v828 = vunpack.c.h.b16 %v216
    %v829 = vunpack.c.l.b16 %v217
    %v830 = vunpack.c.h.b16 %v217
    %v831 = vunpack.c.l.b16 %v218
    %v832 = vunpack.c.h.b16 %v218
    %v833 = vunpack.c.l.b16 %v219
    %v834 = vunpack.c.h.b16 %v219
    %v835 = vunpack.c.l.b16 %v220
    %v836 = vunpack.c.h.b16 %v220
    %v837 = vunpack.c.l.b16 %v221
    %v838 = vunpack.c.h.b16 %v221
    %v839 = vunpack.c.l.b16 %v222
    %v840 = vunpack.c.h.b16 %v222
    %v841 = vunpack.c.l.b16 %v223
    %v842 = vunpack.c.h.b16 %v223
    %v843 = vunpack.c.l.b16 %v224
    %v844 = vunpack.c.h.b16 %v224
    %v845 = vunpack.c.l.b16 %v225
    %v846 = vunpack.c.h.b16 %v225
    %v847 = vunpack.c.l.b16 %v226
    %v848 = vunpack.c.h.b16 %v226
    %v849 = vunpack.c.l.b16 %v227
    %v850 = vunpack.c.h.b16 %v227
    %v851 = vunpack.c.l.b16 %v228
    %v852 = vunpack.c.h.b16 %v228
    %v853 = vunpack.c.l.b16 %v229
    %v854 = vunpack.c.h.b16 %v229
    %v855 = vunpack.c.l.b16 %v230
    %v856 = vunpack.c.h.b16 %v230
    %v857 = vunpack.c.l.b16 %v231
    %v858 = vunpack.c.h.b16 %v231
    %v859 = vunpack.c.l.b16 %v232
    %v860 = vunpack.c.h.b16 %v232
    %v861 = vunpack.c.l.b16 %v233
    %v862 = vunpack.c.h.b16 %v233
    %v863 = vunpack.c.l.b16 %v234
    %v864 = vunpack.c.h.b16 %v234
    %v865 = vunpack.c.l.b16 %v235
    %v866 = vunpack.c.h.b16 %v235
    %v867 = vunpack.c.l.b16 %v236
    %v868 = vunpack.c.h.b16 %v236
    %v869 = vunpack.c.l.b16 %v237
    %v870 = vunpack.c.h.b16 %v237
    %v871 = vunpack.c.l.b16 %v238
    %v872 = vunpack.c.h.b16 %v238
    %v873 = vunpack.c.l.b16 %v239
    %v874 = vunpack.c.h.b16 %v239
    %v875 = vunpack.c.l.b16 %v240
    %v876 = vunpack.c.h.b16 %v240
    %v877 = vunpack.c.l.b16 %v241
    %v878 = vunpack.c.h.b16 %v241
    %v879 = vunpack.c.l.b16 %v242
    %v880 = vunpack.c.h.b16 %v242
    %v881 = vunpack.c.l.b16 %v243
    %v882 = vunpack.c.h.b16 %v243
    %v883 = vunpack.c.l.b16 %v244
    %v884 = vunpack.c.h.b16 %v244
    %v885 = vunpack.c.l.b16 %v245
    %v886 = vunpack.c.h.b16 %v245
    %v887 = vunpack.c.l.b16 %v246
    %v888 = vunpack.c.h.b16 %v246
    %v889 = vunpack.c.l.b16 %v247
    %v890 = vunpack.c.h.b16 %v247
    %v891 = vunpack.c.l.b16 %v248
    %v892 = vunpack.c.h.b16 %v248
    %v893 = vunpack.c.l.b16 %v249
    %v894 = vunpack.c.h.b16 %v249
    %v895 = vunpack.c.l.b16 %v250
    %v896 = vunpack.c.h.b16 %v250
    %v897 = vunpack.c.l.b16 %v251
    %v898 = vunpack.c.h.b16 %v251
    %v899 = vunpack.c.l.b16 %v252
    %v900 = vunpack.c.h.b16 %v252
    %v901 = vunpack.c.l.b16 %v253
    %v902 = vunpack.c.h.b16 %v253
    %v903 = vunpack.c.l.b16 %v254
    %v904 = vunpack.c.h.b16 %v254
    %v905 = vunpack.c.l.b16 %v255
    %v906 = vunpack.c.h.b16 %v255
    %v907 = vunpack.c.l.b16 %v256
    %v908 = vunpack.c.h.b16 %v256
    %v909 = vunpack.c.l.b16 %v257
    %v910 = vunpack.c.h.b16 %v257
    %v911 = vunpack.c.l.b16 %v258
    %v912 = vunpack.c.h.b16 %v258
    %v913 = vunpack.c.l.b16 %v259
    %v914 = vunpack.c.h.b16 %v259
    %v915 = vunpack.c.l.b16 %v260
    %v916 = vunpack.c.h.b16 %v260
    %v917 = vunpack.c.l.b16 %v261
    %v918 = vunpack.c.h.b16 %v261
    %v919 = vunpack.c.l.b16 %v262
    %v920 = vunpack.c.h.b16 %v262
    %v921 = vunpack.c.l.b16 %v263
    %v922 = vunpack.c.h.b16 %v263
    %v923 = vunpack.c.l.b16 %v264
    %v924 = vunpack.c.h.b16 %v264
    %v925 = vunpack.c.l.b16 %v265
    %v926 = vunpack.c.h.b16 %v265
    %v927 = vunpack.c.l.b16 %v266
    %v928 = vunpack.c.h.b16 %v266
    %v929 = vunpack.c.l.b16 %v267
    %v930 = vunpack.c.h.b16 %v267
    %v931 = vunpack.c.l.b16 %v268
    %v932 = vunpack.c.h.b16 %v268
    %v933 = vunpack.c.l.b16 %v269
    %v934 = vunpack.c.h.b16 %v269
    %v935 = vunpack.c.l.b16 %v270
    %v936 = vunpack.c.h.b16 %v270
    %v937 = vunpack.c.l.b16 %v271
    %v938 = vunpack.c.h.b16 %v271
    %v939 = vunpack.c.l.b16 %v272
    %v940 = vunpack.c.h.b16 %v272
    %v941 = vunpack.c.l.b16 %v273
    %v942 = vunpack.c.h.b16 %v273
    %v943 = vunpack.c.l.b16 %v274
    %v944 = vunpack.c.h.b16 %v274
    %v945 = vunpack.c.l.b16 %v275
    %v946 = vunpack.c.h.b16 %v275
    %v947 = vunpack.c.l.b16 %v276
    %v948 = vunpack.c.h.b16 %v276
    %v949 = vunpack.c.l.b16 %v277
    %v950 = vunpack.c.h.b16 %v277
    %v951 = vunpack.c.l.b16 %v278
    %v952 = vunpack.c.h.b16 %v278
    %v953 = vunpack.c.l.b16 %v279
    %v954 = vunpack.c.h.b16 %v279
    %v955 = vunpack.c.l.b16 %v280
    %v956 = vunpack.c.h.b16 %v280
    %v957 = vunpack.c.l.b16 %v281
    %v958 = vunpack.c.h.b16 %v281
    %v959 = vunpack.c.l.b16 %v282
    %v960 = vunpack.c.h.b16 %v282
    %v961 = vunpack.c.l.b16 %v283
    %v962 = vunpack.c.h.b16 %v283
    %v963 = vunpack.c.l.b16 %v284
    %v964 = vunpack.c.h.b16 %v284
    %v965 = vunpack.c.l.b16 %v285
    %v966 = vunpack.c.h.b16 %v285
    %v967 = vunpack.c.l.b16 %v286
    %v968 = vunpack.c.h.b16 %v286
    %v969 = vunpack.c.l.b16 %v287
    %v970 = vunpack.c.h.b16 %v287
    %v971 = vunpack.c.l.b16 %v288
    %v972 = vunpack.c.h.b16 %v288
    %v973 = vunpack.c.l.b16 %v289
    %v974 = vunpack.c.h.b16 %v289
    %v975 = vunpack.c.l.b16 %v290
    %v976 = vunpack.c.h.b16 %v290
    %v977 = vunpack.c.l.b16 %v291
    %v978 = vunpack.c.h.b16 %v291
    %v979 = vunpack.c.l.b16 %v292
    %v980 = vunpack.c.h.b16 %v292
    %v981 = vunpack.c.l.b16 %v293
    %v982 = vunpack.c.h.b16 %v293
    %v983 = vunpack.c.l.b16 %v294
    %v984 = vunpack.c.h.b16 %v294
    %v985 = vunpack.c.l.b16 %v295
    %v986 = vunpack.c.h.b16 %v295
    %v987 = vunpack.c.l.b16 %v296
    %v988 = vunpack.c.h.b16 %v296
    %v989 = vunpack.c.l.b16 %v297
    %v990 = vunpack.c.h.b16 %v297
    %v991 = vunpack.c.l.b16 %v298
    %v992 = vunpack.c.h.b16 %v298
    %v993 = vunpack.c.l.b16 %v299
    %v994 = vunpack.c.h.b16 %v299
    %v995 = vunpack.c.l.b16 %v300
    %v996 = vunpack.c.h.b16 %v300
    %v997 = vunpack.c.l.b16 %v301
    %v998 = vunpack.c.h.b16 %v301
    %v999 = vunpack.c.l.b16 %v302
    %v1000 = vunpack.c.h.b16 %v302
    %v1001 = vunpack.c.l.b16 %v303
    %v1002 = vunpack.c.h.b16 %v303
    %v1003 = vunpack.c.l.b16 %v304
    %v1004 = vunpack.c.h.b16 %v304
    %v1005 = vunpack.c.l.b16 %v305
    %v1006 = vunpack.c.h.b16 %v305
    %v1007 = vunpack.c.l.b16 %v306
    %v1008 = vunpack.c.h.b16 %v306
    %v1009 = vunpack.c.l.b16 %v307
    %v1010 = vunpack.c.h.b16 %v307
    %v1011 = vunpack.c.l.b16 %v308
    %v1012 = vunpack.c.h.b16 %v308
    %v1013 = vunpack.c.l.b16 %v309
    %v1014 = vunpack.c.h.b16 %v309
    %v1015 = vunpack.c.l.b16 %v310
    %v1016 = vunpack.c.h.b16 %v310
    %v1017 = vunpack.c.l.b16 %v311
    %v1018 = vunpack.c.h.b16 %v311
    %v1019 = vunpack.c.l.b16 %v312
    %v1020 = vunpack.c.h.b16 %v312
    %v1021 = vunpack.c.l.b16 %v313
    %v1022 = vunpack.c.h.b16 %v313
    %v1023 = vunpack.c.l.b16 %v314
    %v1024 = vunpack.c.h.b16 %v314
    %v1025 = vunpack.c.l.b16 %v315
    %v1026 = vunpack.c.h.b16 %v315
    %v1027 = vunpack.c.l.b16 %v316
    %v1028 = vunpack.c.h.b16 %v316
    %v1029 = vunpack.c.l.b16 %v317
    %v1030 = vunpack.c.h.b16 %v317
    %v1031 = vunpack.c.l.b16 %v318
    %v1032 = vunpack.c.h.b16 %v318
    %v1033 = vunpack.c.l.b16 %v319
    %v1034 = vunpack.c.h.b16 %v319
    %v1035 = vunpack.c.l.b16 %v320
    %v1036 = vunpack.c.h.b16 %v320
    %v1037 = vunpack.c.l.b16 %v321
    %v1038 = vunpack.c.h.b16 %v321
    %v1039 = vunpack.c.l.b16 %v322
    %v1040 = vunpack.c.h.b16 %v322
    %v1041 = vunpack.c.l.b16 %v323
    %v1042 = vunpack.c.h.b16 %v323
    %v1043 = vunpack.c.l.b16 %v324
    %v1044 = vunpack.c.h.b16 %v324
    %v1045 = vunpack.c.l.b16 %v325
    %v1046 = vunpack.c.h.b16 %v325
    %v1047 = vunpack.c.l.b16 %v326
    %v1048 = vunpack.c.h.b16 %v326
    %v1049 = vunpack.c.l.b16 %v327
    %v1050 = vunpack.c.h.b16 %v327
    %v1051 = vunpack.c.l.b16 %v328
    %v1052 = vunpack.c.h.b16 %v328
    %v1053 = vunpack.c.l.b16 %v329
    %v1054 = vunpack.c.h.b16 %v329
    %v1055 = vunpack.c.l.b16 %v330
    %v1056 = vunpack.c.h.b16 %v330
    %v1057 = vunpack.c.l.b16 %v331
    %v1058 = vunpack.c.h.b16 %v331
    %v1059 = vunpack.c.l.b16 %v332
    %v1060 = vunpack.c.h.b16 %v332
    %v1061 = vunpack.c.l.b16 %v333
    %v1062 = vunpack.c.h.b16 %v333
    %v1063 = vunpack.c.l.b16 %v334
    %v1064 = vunpack.c.h.b16 %v334
    %v1065 = vunpack.c.l.b16 %v335
    %v1066 = vunpack.c.h.b16 %v335
    %v1067 = vunpack.c.l.b16 %v336
    %v1068 = vunpack.c.h.b16 %v336
    %v1069 = vunpack.c.l.b16 %v337
    %v1070 = vunpack.c.h.b16 %v337
    %v1071 = vunpack.c.l.b16 %v338
    %v1072 = vunpack.c.h.b16 %v338
    %v1073 = vunpack.c.l.b16 %v339
    %v1074 = vunpack.c.h.b16 %v339
    %v1075 = vunpack.c.l.b16 %v340
    %v1076 = vunpack.c.h.b16 %v340
    %v1077 = vunpack.c.l.b16 %v341
    %v1078 = vunpack.c.h.b16 %v341
    %v1079 = vunpack.c.l.b16 %v342
    %v1080 = vunpack.c.h.b16 %v342
    %v1081 = vunpack.c.l.b16 %v343
    %v1082 = vunpack.c.h.b16 %v343
    %v1083 = vunpack.c.l.b16 %v344
    %v1084 = vunpack.c.h.b16 %v344
    %v1085 = vunpack.c.l.b16 %v345
    %v1086 = vunpack.c.h.b16 %v345
    %v1087 = vunpack.c.l.b16 %v346
    %v1088 = vunpack.c.h.b16 %v346
    %v1089 = vunpack.c.l.b16 %v347
    %v1090 = vunpack.c.h.b16 %v347
    %v1091 = vunpack.c.l.b16 %v348
    %v1092 = vunpack.c.h.b16 %v348
    %v1093 = vunpack.c.l.b16 %v349
    %v1094 = vunpack.c.h.b16 %v349
    %v1095 = vunpack.c.l.b16 %v350
    %v1096 = vunpack.c.h.b16 %v350
    %v1097 = vunpack.c.l.b16 %v351
    %v1098 = vunpack.c.h.b16 %v351
    %v1099 = vunpack.c.l.b16 %v352
    %v1100 = vunpack.c.h.b16 %v352
    %v1101 = vunpack.c.l.b16 %v353
    %v1102 = vunpack.c.h.b16 %v353
    %v1103 = vunpack.c.l.b16 %v354
    %v1104 = vunpack.c.h.b16 %v354
    %v1105 = vunpack.c.l.b16 %v355
    %v1106 = vunpack.c.h.b16 %v355
    %v1107 = vunpack.c.l.b16 %v356
    %v1108 = vunpack.c.h.b16 %v356
    %v1109 = vunpack.c.l.b16 %v357
    %v1110 = vunpack.c.h.b16 %v357
    %v1111 = vunpack.c.l.b16 %v358
    %v1112 = vunpack.c.h.b16 %v358
    %v1113 = vunpack.c.l.b16 %v359
    %v1114 = vunpack.c.h.b16 %v359
    %v1115 = vunpack.c.l.b16 %v360
    %v1116 = vunpack.c.h.b16 %v360
    %v1117 = vunpack.c.l.b16 %v361
    %v1118 = vunpack.c.h.b16 %v361
    %v1119 = vunpack.c.l.b16 %v362
    %v1120 = vunpack.c.h.b16 %v362
    %v1121 = vunpack.c.l.b16 %v363
    %v1122 = vunpack.c.h.b16 %v363
    %v1123 = vunpack.c.l.b16 %v364
    %v1124 = vunpack.c.h.b16 %v364
    %v1125 = vunpack.c.l.b16 %v365
    %v1126 = vunpack.c.h.b16 %v365
    %v1127 = vunpack.c.l.b16 %v366
    %v1128 = vunpack.c.h.b16 %v366
    %v1129 = vunpack.c.l.b16 %v367
    %v1130 = vunpack.c.h.b16 %v367
    %v1131 = vunpack.c.l.b16 %v368
    %v1132 = vunpack.c.h.b16 %v368
    %v1133 = vunpack.c.l.b16 %v369
    %v1134 = vunpack.c.h.b16 %v369
    %v1135 = vunpack.c.l.b16 %v370
    %v1136 = vunpack.c.h.b16 %v370
    %v1137 = vunpack.c.l.b16 %v371
    %v1138 = vunpack.c.h.b16 %v371
    %v1139 = vunpack.c.l.b16 %v372
    %v1140 = vunpack.c.h.b16 %v372
    %v1141 = vunpack.c.l.b16 %v373
    %v1142 = vunpack.c.h.b16 %v373
    %v1143 = vunpack.c.l.b16 %v374
    %v1144 = vunpack.c.h.b16 %v374
    %v1145 = vunpack.c.l.b16 %v375
    %v1146 = vunpack.c.h.b16 %v375
    %v1147 = vunpack.c.l.b16 %v376
    %v1148 = vunpack.c.h.b16 %v376
    %v1149 = vunpack.c.l.b16 %v377
    %v1150 = vunpack.c.h.b16 %v377
    %v1151 = vunpack.c.l.b16 %v378
    %v1152 = vunpack.c.h.b16 %v378
    %v1153 = vunpack.c.l.b16 %v379
    %v1154 = vunpack.c.h.b16 %v379
    %v1155 = vunpack.c.l.b16 %v380
    %v1156 = vunpack.c.h.b16 %v380
    %v1157 = vunpack.c.l.b16 %v381
    %v1158 = vunpack.c.h.b16 %v381
    %v1159 = vunpack.c.l.b16 %v382
    %v1160 = vunpack.c.h.b16 %v382
    %v1161 = vpack.c.b16 %v653, %v649
    %v1162 = vpack.c.b16 %v654, %v650
    %v1163 = vpack.c.b16 %v655, %v651
    %v1164 = vpack.c.b16 %v656, %v652
    %v1165 = vpack.c.b16 %v661, %v657
    %v1166 = vpack.c.b16 %v662, %v658
    %v1167 = vpack.c.b16 %v663, %v659
    %v1168 = vpack.c.b16 %v664, %v660
    %v1169 = vpack.c.b16 %v669, %v665
    %v1170 = vpack.c.b16 %v670, %v666
    %v1171 = vpack.c.b16 %v671, %v667
    %v1172 = vpack.c.b16 %v672, %v668
    %v1173 = vpack.c.b16 %v677, %v673
    %v1174 = vpack.c.b16 %v678, %v674
    %v1175 = vpack.c.b16 %v679, %v675
    %v1176 = vpack.c.b16 %v680, %v676
    %v1177 = vpack.c.b16 %v685, %v681
    %v1178 = vpack.c.b16 %v686, %v682
    %v1179 = vpack.c.b16 %v687, %v683
    %v1180 = vpack.c.b16 %v688, %v684
    %v1181 = vpack.c.b16 %v693, %v689
    %v1182 = vpack.c.b16 %v694, %v690
    %v1183 = vpack.c.b16 %v695, %v691
    %v1184 = vpack.c.b16 %v696, %v692
    %v1185 = vpack.c.b16 %v701, %v697
    %v1186 = vpack.c.b16 %v702, %v698
    %v1187 = vpack.c.b16 %v703, %v699
    %v1188 = vpack.c.b16 %v704, %v700
    %v1189 = vpack.c.b16 %v709, %v705
    %v1190 = vpack.c.b16 %v710, %v706
    %v1191 = vpack.c.b16 %v711, %v707
    %v1192 = vpack.c.b16 %v712, %v708
    %v1193 = vpack.c.b16 %v717, %v713
    %v1194 = vpack.c.b16 %v718, %v714
    %v1195 = vpack.c.b16 %v719, %v715
    %v1196 = vpack.c.b16 %v720, %v716
    %v1197 = vpack.c.b16 %v725, %v721
    %v1198 = vpack.c.b16 %v726, %v722
    %v1199 = vpack.c.b16 %v727, %v723
    %v1200 = vpack.c.b16 %v728, %v724
    %v1201 = vpack.c.b16 %v733, %v729
    %v1202 = vpack.c.b16 %v734, %v730
    %v1203 = vpack.c.b16 %v735, %v731
    %v1204 = vpack.c.b16 %v736, %v732
    %v1205 = vpack.c.b16 %v741, %v737
    %v1206 = vpack.c.b16 %v742, %v738
    %v1207 = vpack.c.b16 %v743, %v739
    %v1208 = vpack.c.b16 %v744, %v740
    %v1209 = vpack.c.b16 %v749, %v745
    %v1210 = vpack.c.b16 %v750, %v746
    %v1211 = vpack.c.b16 %v751, %v747
    %v1212 = vpack.c.b16 %v752, %v748
    %v1213 = vpack.c.b16 %v757, %v753
    %v1214 = vpack.c.b16 %v758, %v754
    %v1215 = vpack.c.b16 %v759, %v755
    %v1216 = vpack.c.b16 %v760, %v756
    %v1217 = vpack.c.b16 %v765, %v761
    %v1218 = vpack.c.b16 %v766, %v762
    %v1219 = vpack.c.b16 %v767, %v763
    %v1220 = vpack.c.b16 %v768, %v764
    %v1221 = vpack.c.b16 %v773, %v769
    %v1222 = vpack.c.b16 %v774, %v770
    %v1223 = vpack.c.b16 %v775, %v771
    %v1224 = vpack.c.b16 %v776, %v772
    %v1225 = vpack.c.b16 %v781, %v777
    %v1226 = vpack.c.b16 %v782, %v778
    %v1227 = vpack.c.b16 %v783, %v779
    %v1228 = vpack.c.b16 %v784, %v780
    %v1229 = vpack.c.b16 %v789, %v785
    %v1230 = vpack.c.b16 %v790, %v786
    %v1231 = vpack.c.b16 %v791, %v787
    %v1232 = vpack.c.b16 %v792, %v788
    %v1233 = vpack.c.b16 %v797, %v793
    %v1234 = vpack.c.b16 %v798, %v794
    %v1235 = vpack.c.b16 %v799, %v795
    %v1236 = vpack.c.b16 %v800, %v796
    %v1237 = vpack.c.b16 %v805, %v801
    %v1238 = vpack.c.b16 %v806, %v802
    %v1239 = vpack.c.b16 %v807, %v803
    %v1240 = vpack.c.b16 %v808, %v804
    %v1241 = vpack.c.b16 %v813, %v809
    %v1242 = vpack.c.b16 %v814, %v810
    %v1243 = vpack.c.b16 %v815, %v811
    %v1244 = vpack.c.b16 %v816, %v812
    %v1245 = vpack.c.b16 %v821, %v817
    %v1246 = vpack.c.b16 %v822, %v818
    %v1247 = vpack.c.b16 %v823, %v819
    %v1248 = vpack.c.b16 %v824, %v820
    %v1249 = vpack.c.b16 %v829, %v825
    %v1250 = vpack.c.b16 %v830, %v826
    %v1251 = vpack.c.b16 %v831, %v827
    %v1252 = vpack.c.b16 %v832, %v828
    %v1253 = vpack.c.b16 %v837, %v833
    %v1254 = vpack.c.b16 %v838, %v834
    %v1255 = vpack.c.b16 %v839, %v835
    %v1256 = vpack.c.b16 %v840, %v836
    %v1257 = vpack.c.b16 %v845, %v841
    %v1258 = vpack.c.b16 %v846, %v842
    %v1259 = vpack.c.b16 %v847, %v843
    %v1260 = vpack.c.b16 %v848, %v844
    %v1261 = vpack.c.b16 %v853, %v849
    %v1262 = vpack.c.b16 %v854, %v850
    %v1263 = vpack.c.b16 %v855, %v851
    %v1264 = vpack.c.b16 %v856, %v852
    %v1265 = vpack.c.b16 %v861, %v857
    %v1266 = vpack.c.b16 %v862, %v858
    %v1267 = vpack.c.b16 %v863, %v859
    %v1268 = vpack.c.b16 %v864, %v860
    %v1269 = vpack.c.b16 %v869, %v865
    %v1270 = vpack.c.b16 %v870, %v866
    %v1271 = vpack.c.b16 %v871, %v867
    %v1272 = vpack.c.b16 %v872, %v868
    %v1273 = vpack.c.b16 %v877, %v873
    %v1274 = vpack.c.b16 %v878, %v874
    %v1275 = vpack.c.b16 %v879, %v875
    %v1276 = vpack.c.b16 %v880, %v876
    %v1277 = vpack.c.b16 %v885, %v881
    %v1278 = vpack.c.b16 %v886, %v882
    %v1279 = vpack.c.b16 %v887, %v883
    %v1280 = vpack.c.b16 %v888, %v884
    %v1281 = vpack.c.b16 %v893, %v889
    %v1282 = vpack.c.b16 %v894, %v890
    %v1283 = vpack.c.b16 %v895, %v891
    %v1284 = vpack.c.b16 %v896, %v892
    %v1285 = vpack.c.b16 %v901, %v897
    %v1286 = vpack.c.b16 %v902, %v898
    %v1287 = vpack.c.b16 %v903, %v899
    %v1288 = vpack.c.b16 %v904, %v900
    %v1289 = vpack.c.b16 %v909, %v905
    %v1290 = vpack.c.b16 %v910, %v906
    %v1291 = vpack.c.b16 %v911, %v907
    %v1292 = vpack.c.b16 %v912, %v908
    %v1293 = vpack.c.b16 %v917, %v913
    %v1294 = vpack.c.b16 %v918, %v914
    %v1295 = vpack.c.b16 %v919, %v915
    %v1296 = vpack.c.b16 %v920, %v916
    %v1297 = vpack.c.b16 %v925, %v921
    %v1298 = vpack.c.b16 %v926, %v922
    %v1299 = vpack.c.b16 %v927, %v923
    %v1300 = vpack.c.b16 %v928, %v924
    %v1301 = vpack.c.b16 %v933, %v929
    %v1302 = vpack.c.b16 %v934, %v930
    %v1303 = vpack.c.b16 %v935, %v931
    %v1304 = vpack.c.b16 %v936, %v932
    %v1305 = vpack.c.b16 %v941, %v937
    %v1306 = vpack.c.b16 %v942, %v938
    %v1307 = vpack.c.b16 %v943, %v939
    %v1308 = vpack.c.b16 %v944, %v940
    %v1309 = vpack.c.b16 %v949, %v945
    %v1310 = vpack.c.b16 %v950, %v946
    %v1311 = vpack.c.b16 %v951, %v947
    %v1312 = vpack.c.b16 %v952, %v948
    %v1313 = vpack.c.b16 %v957, %v953
    %v1314 = vpack.c.b16 %v958, %v954
    %v1315 = vpack.c.b16 %v959, %v955
    %v1316 = vpack.c.b16 %v960, %v956
    %v1317 = vpack.c.b16 %v965, %v961
    %v1318 = vpack.c.b16 %v966, %v962
    %v1319 = vpack.c.b16 %v967, %v963
    %v1320 = vpack.c.b16 %v968, %v964
    %v1321 = vpack.c.b16 %v973, %v969
    %v1322 = vpack.c.b16 %v974, %v970
    %v1323 = vpack.c.b16 %v975, %v971
    %v1324 = vpack.c.b16 %v976, %v972
    %v1325 = vpack.c.b16 %v981, %v977
    %v1326 = vpack.c.b16 %v982, %v978
    %v1327 = vpack.c.b16 %v983, %v979
    %v1328 = vpack.c.b16 %v984, %v980
    %v1329 = vpack.c.b16 %v989, %v985
    %v1330 = vpack.c.b16 %v990, %v986
    %v1331 = vpack.c.b16 %v991, %v987
    %v1332 = vpack.c.b16 %v992, %v988
    %v1333 = vpack.c.b16 %v997, %v993
    %v1334 = vpack.c.b16 %v998, %v994
    %v1335 = vpack.c.b16 %v999, %v995
    %v1336 = vpack.c.b16 %v1000, %v996
    %v1337 = vpack.c.b16 %v1005, %v1001
    %v1338 = vpack.c.b16 %v1006, %v1002
    %v1339 = vpack.c.b16 %v1007, %v1003
    %v1340 = vpack.c.b16 %v1008, %v1004
    %v1341 = vpack.c.b16 %v1013, %v1009
    %v1342 = vpack.c.b16 %v1014, %v1010
    %v1343 = vpack.c.b16 %v1015, %v1011
    %v1344 = vpack.c.b16 %v1016, %v1012
    %v1345 = vpack.c.b16 %v1021, %v1017
    %v1346 = vpack.c.b16 %v1022, %v1018
    %v1347 = vpack.c.b16 %v1023, %v1019
    %v1348 = vpack.c.b16 %v1024, %v1020
    %v1349 = vpack.c.b16 %v1029, %v1025
    %v1350 = vpack.c.b16 %v1030, %v1026
    %v1351 = vpack.c.b16 %v1031, %v1027
    %v1352 = vpack.c.b16 %v1032, %v1028
    %v1353 = vpack.c.b16 %v1037, %v1033
    %v1354 = vpack.c.b16 %v1038, %v1034
    %v1355 = vpack.c.b16 %v1039, %v1035
    %v1356 = vpack.c.b16 %v1040, %v1036
    %v1357 = vpack.c.b16 %v1045, %v1041
    %v1358 = vpack.c.b16 %v1046, %v1042
    %v1359 = vpack.c.b16 %v1047, %v1043
    %v1360 = vpack.c.b16 %v1048, %v1044
    %v1361 = vpack.c.b16 %v1053, %v1049
    %v1362 = vpack.c.b16 %v1054, %v1050
    %v1363 = vpack.c.b16 %v1055, %v1051
    %v1364 = vpack.c.b16 %v1056, %v1052
    %v1365 = vpack.c.b16 %v1061, %v1057
    %v1366 = vpack.c.b16 %v1062, %v1058
    %v1367 = vpack.c.b16 %v1063, %v1059
    %v1368 = vpack.c.b16 %v1064, %v1060
    %v1369 = vpack.c.b16 %v1069, %v1065
    %v1370 = vpack.c.b16 %v1070, %v1066
    %v1371 = vpack.c.b16 %v1071, %v1067
    %v1372 = vpack.c.b16 %v1072, %v1068
    %v1373 = vpack.c.b16 %v1077, %v1073
    %v1374 = vpack.c.b16 %v1078, %v1074
    %v1375 = vpack.c.b16 %v1079, %v1075
    %v1376 = vpack.c.b16 %v1080, %v1076
    %v1377 = vpack.c.b16 %v1085, %v1081
    %v1378 = vpack.c.b16 %v1086, %v1082
    %v1379 = vpack.c.b16 %v1087, %v1083
    %v1380 = vpack.c.b16 %v1088, %v1084
    %v1381 = vpack.c.b16 %v1093, %v1089
    %v1382 = vpack.c.b16 %v1094, %v1090
    %v1383 = vpack.c.b16 %v1095, %v1091
    %v1384 = vpack.c.b16 %v1096, %v1092
    %v1385 = vpack.c.b16 %v1101, %v1097
    %v1386 = vpack.c.b16 %v1102, %v1098
    %v1387 = vpack.c.b16 %v1103, %v1099
    %v1388 = vpack.c.b16 %v1104, %v1100
    %v1389 = vpack.c.b16 %v1109, %v1105
    %v1390 = vpack.c.b16 %v1110, %v1106
    %v1391 = vpack.c.b16 %v1111, %v1107
    %v1392 = vpack.c.b16 %v1112, %v1108
    %v1393 = vpack.c.b16 %v1117, %v1113
    %v1394 = vpack.c.b16 %v1118, %v1114
    %v1395 = vpack.c.b16 %v1119, %v1115
    %v1396 = vpack.c.b16 %v1120, %v1116
    %v1397 = vpack.c.b16 %v1125, %v1121
    %v1398 = vpack.c.b16 %v1126, %v1122
    %v1399 = vpack.c.b16 %v1127, %v1123
    %v1400 = vpack.c.b16 %v1128, %v1124
    %v1401 = vpack.c.b16 %v1133, %v1129
    %v1402 = vpack.c.b16 %v1134, %v1130
    %v1403 = vpack.c.b16 %v1135, %v1131
    %v1404 = vpack.c.b16 %v1136, %v1132
    %v1405 = vpack.c.b16 %v1141, %v1137
    %v1406 = vpack.c.b16 %v1142, %v1138
    %v1407 = vpack.c.b16 %v1143, %v1139
    %v1408 = vpack.c.b16 %v1144, %v1140
    %v1409 = vpack.c.b16 %v1149, %v1145
    %v1410 = vpack.c.b16 %v1150, %v1146
    %v1411 = vpack.c.b16 %v1151, %v1147
    %v1412 = vpack.c.b16 %v1152, %v1148
    %v1413 = vpack.c.b16 %v1157, %v1153
    %v1414 = vpack.c.b16 %v1158, %v1154
    %v1415 = vpack.c.b16 %v1159, %v1155
    %v1416 = vpack.c.b16 %v1160, %v1156
    %1673 = vmatpush.bf16.msra.mxu0 %v1189
    %1674 = vmatpush.bf16.msra.mxu0 %v1185
    %1675 = vmatpush.bf16.msra.mxu0 %v1181
    %1676 = vmatpush.bf16.msra.mxu0 %v1177
    %1677 = vmatpush.bf16.msra.mxu0 %v1173
    %1678 = vmatpush.bf16.msra.mxu0 %v1169
    %1679 = vmatpush.bf16.msra.mxu0 %v1165
    %1680 = vmatpush.bf16.msra.mxu0 %v1161
    %1681 = vmatmul.bf16.gmra.mxu0 %v119
    %v1682 = vpop.f32.mrf.mxu0
    %v1683 = vadd.f32 %v385, %v1682
    %v1684 = vpop.f32.mrf.mxu0
    %v1685 = vadd.f32 %v385, %v1684
    %1686 = vdwg.mxu0
    %1687 = vmatpush.bf16.msra.mxu0 %v1221
    %1688 = vmatpush.bf16.msra.mxu0 %v1217
    %1689 = vmatpush.bf16.msra.mxu0 %v1213
    %1690 = vmatpush.bf16.msra.mxu0 %v1209
    %1691 = vmatpush.bf16.msra.mxu0 %v1205
    %1692 = vmatpush.bf16.msra.mxu0 %v1201
    %1693 = vmatpush.bf16.msra.mxu0 %v1197
    %1694 = vmatpush.bf16.msra.mxu0 %v1193
    %1695 = vmatmul.bf16.gmra.mxu0 %v120
    %v1696 = vpop.f32.mrf.mxu0
    %v1697 = vadd.f32 %v1683, %v1696
    %v1698 = vpop.f32.mrf.mxu0
    %v1699 = vadd.f32 %v1685, %v1698
    %1700 = vdwg.mxu0
    %1701 = vmatpush.bf16.msra.mxu0 %v1253
    %1702 = vmatpush.bf16.msra.mxu0 %v1249
    %1703 = vmatpush.bf16.msra.mxu0 %v1245
    %1704 = vmatpush.bf16.msra.mxu0 %v1241
    %1705 = vmatpush.bf16.msra.mxu0 %v1237
    %1706 = vmatpush.bf16.msra.mxu0 %v1233
    %1707 = vmatpush.bf16.msra.mxu0 %v1229
    %1708 = vmatpush.bf16.msra.mxu0 %v1225
    %1709 = vmatmul.bf16.gmra.mxu0 %v121
    %v1710 = vpop.f32.mrf.mxu0
    %v1711 = vadd.f32 %v1697, %v1710
    %v1712 = vpop.f32.mrf.mxu0
    %v1713 = vadd.f32 %v1699, %v1712
    %1714 = vdwg.mxu0
    %1715 = vmatpush.bf16.msra.mxu0 %v1285
    %1716 = vmatpush.bf16.msra.mxu0 %v1281
    %1717 = vmatpush.bf16.msra.mxu0 %v1277
    %1718 = vmatpush.bf16.msra.mxu0 %v1273
    %1719 = vmatpush.bf16.msra.mxu0 %v1269
    %1720 = vmatpush.bf16.msra.mxu0 %v1265
    %1721 = vmatpush.bf16.msra.mxu0 %v1261
    %1722 = vmatpush.bf16.msra.mxu0 %v1257
    %1723 = vmatmul.bf16.gmra.mxu0 %v122
    %v1724 = vpop.f32.mrf.mxu0
    %v1725 = vadd.f32 %v1711, %v1724
    %v1726 = vpop.f32.mrf.mxu0
    %v1727 = vadd.f32 %v1713, %v1726
    %1728 = vdwg.mxu0
    %1729 = vmatpush.bf16.msra.mxu0 %v1317
    %1730 = vmatpush.bf16.msra.mxu0 %v1313
    %1731 = vmatpush.bf16.msra.mxu0 %v1309
    %1732 = vmatpush.bf16.msra.mxu0 %v1305
    %1733 = vmatpush.bf16.msra.mxu0 %v1301
    %1734 = vmatpush.bf16.msra.mxu0 %v1297
    %1735 = vmatpush.bf16.msra.mxu0 %v1293
    %1736 = vmatpush.bf16.msra.mxu0 %v1289
    %1737 = vmatmul.bf16.gmra.mxu0 %v123
    %v1738 = vpop.f32.mrf.mxu0
    %v1739 = vadd.f32 %v1725, %v1738
    %v1740 = vpop.f32.mrf.mxu0
    %v1741 = vadd.f32 %v1727, %v1740
    %1742 = vdwg.mxu0
    %1743 = vmatpush.bf16.msra.mxu0 %v1349
    %1744 = vmatpush.bf16.msra.mxu0 %v1345
    %1745 = vmatpush.bf16.msra.mxu0 %v1341
    %1746 = vmatpush.bf16.msra.mxu0 %v1337
    %1747 = vmatpush.bf16.msra.mxu0 %v1333
    %1748 = vmatpush.bf16.msra.mxu0 %v1329
    %1749 = vmatpush.bf16.msra.mxu0 %v1325
    %1750 = vmatpush.bf16.msra.mxu0 %v1321
    %1751 = vmatmul.bf16.gmra.mxu0 %v124
    %v1752 = vpop.f32.mrf.mxu0
    %v1753 = vadd.f32 %v1739, %v1752
    %v1754 = vpop.f32.mrf.mxu0
    %v1755 = vadd.f32 %v1741, %v1754
    %1756 = vdwg.mxu0
    %1757 = vmatpush.bf16.msra.mxu0 %v1381
    %1758 = vmatpush.bf16.msra.mxu0 %v1377
    %1759 = vmatpush.bf16.msra.mxu0 %v1373
    %1760 = vmatpush.bf16.msra.mxu0 %v1369
    %1761 = vmatpush.bf16.msra.mxu0 %v1365
    %1762 = vmatpush.bf16.msra.mxu0 %v1361
    %1763 = vmatpush.bf16.msra.mxu0 %v1357
    %1764 = vmatpush.bf16.msra.mxu0 %v1353
    %1765 = vmatmul.bf16.gmra.mxu0 %v125
    %v1766 = vpop.f32.mrf.mxu0
    %v1767 = vadd.f32 %v1753, %v1766
    %v1768 = vpop.f32.mrf.mxu0
    %v1769 = vadd.f32 %v1755, %v1768
    %1770 = vdwg.mxu0
    %1771 = vmatpush.bf16.msra.mxu0 %v1413
    %1772 = vmatpush.bf16.msra.mxu0 %v1409
    %1773 = vmatpush.bf16.msra.mxu0 %v1405
    %1774 = vmatpush.bf16.msra.mxu0 %v1401
    %1775 = vmatpush.bf16.msra.mxu0 %v1397
    %1776 = vmatpush.bf16.msra.mxu0 %v1393
    %1777 = vmatpush.bf16.msra.mxu0 %v1389
    %1778 = vmatpush.bf16.msra.mxu0 %v1385
    %1779 = vmatmul.bf16.gmra.mxu0 %v126
    %v1780 = vpop.f32.mrf.mxu0
    %v1781 = vadd.f32 %v1767, %v1780
    %v1782 = vpop.f32.mrf.mxu0
    %v1783 = vadd.f32 %v1769, %v1782
    %1784 = vdwg.mxu0
    %1785 = vmatpush.bf16.msra.mxu0 %v1190
    %1786 = vmatpush.bf16.msra.mxu0 %v1186
    %1787 = vmatpush.bf16.msra.mxu0 %v1182
    %1788 = vmatpush.bf16.msra.mxu0 %v1178
    %1789 = vmatpush.bf16.msra.mxu0 %v1174
    %1790 = vmatpush.bf16.msra.mxu0 %v1170
    %1791 = vmatpush.bf16.msra.mxu0 %v1166
    %1792 = vmatpush.bf16.msra.mxu0 %v1162
    %1793 = vmatmul.bf16.gmra.mxu0 %v119
    %v1794 = vpop.f32.mrf.mxu0
    %v1795 = vadd.f32 %v386, %v1794
    %v1796 = vpop.f32.mrf.mxu0
    %v1797 = vadd.f32 %v386, %v1796
    %1798 = vdwg.mxu0
    %1799 = vmatpush.bf16.msra.mxu0 %v1222
    %1800 = vmatpush.bf16.msra.mxu0 %v1218
    %1801 = vmatpush.bf16.msra.mxu0 %v1214
    %1802 = vmatpush.bf16.msra.mxu0 %v1210
    %1803 = vmatpush.bf16.msra.mxu0 %v1206
    %1804 = vmatpush.bf16.msra.mxu0 %v1202
    %1805 = vmatpush.bf16.msra.mxu0 %v1198
    %1806 = vmatpush.bf16.msra.mxu0 %v1194
    %1807 = vmatmul.bf16.gmra.mxu0 %v120
    %v1808 = vpop.f32.mrf.mxu0
    %v1809 = vadd.f32 %v1795, %v1808
    %v1810 = vpop.f32.mrf.mxu0
    %v1811 = vadd.f32 %v1797, %v1810
    %1812 = vdwg.mxu0
    %1813 = vmatpush.bf16.msra.mxu0 %v1254
    %1814 = vmatpush.bf16.msra.mxu0 %v1250
    %1815 = vmatpush.bf16.msra.mxu0 %v1246
    %1816 = vmatpush.bf16.msra.mxu0 %v1242
    %1817 = vmatpush.bf16.msra.mxu0 %v1238
    %1818 = vmatpush.bf16.msra.mxu0 %v1234
    %1819 = vmatpush.bf16.msra.mxu0 %v1230
    %1820 = vmatpush.bf16.msra.mxu0 %v1226
    %1821 = vmatmul.bf16.gmra.mxu0 %v121
    %v1822 = vpop.f32.mrf.mxu0
    %v1823 = vadd.f32 %v1809, %v1822
    %v1824 = vpop.f32.mrf.mxu0
    %v1825 = vadd.f32 %v1811, %v1824
    %1826 = vdwg.mxu0
    %1827 = vmatpush.bf16.msra.mxu0 %v1286
    %1828 = vmatpush.bf16.msra.mxu0 %v1282
    %1829 = vmatpush.bf16.msra.mxu0 %v1278
    %1830 = vmatpush.bf16.msra.mxu0 %v1274
    %1831 = vmatpush.bf16.msra.mxu0 %v1270
    %1832 = vmatpush.bf16.msra.mxu0 %v1266
    %1833 = vmatpush.bf16.msra.mxu0 %v1262
    %1834 = vmatpush.bf16.msra.mxu0 %v1258
    %1835 = vmatmul.bf16.gmra.mxu0 %v122
    %v1836 = vpop.f32.mrf.mxu0
    %v1837 = vadd.f32 %v1823, %v1836
    %v1838 = vpop.f32.mrf.mxu0
    %v1839 = vadd.f32 %v1825, %v1838
    %1840 = vdwg.mxu0
    %1841 = vmatpush.bf16.msra.mxu0 %v1318
    %1842 = vmatpush.bf16.msra.mxu0 %v1314
    %1843 = vmatpush.bf16.msra.mxu0 %v1310
    %1844 = vmatpush.bf16.msra.mxu0 %v1306
    %1845 = vmatpush.bf16.msra.mxu0 %v1302
    %1846 = vmatpush.bf16.msra.mxu0 %v1298
    %1847 = vmatpush.bf16.msra.mxu0 %v1294
    %1848 = vmatpush.bf16.msra.mxu0 %v1290
    %1849 = vmatmul.bf16.gmra.mxu0 %v123
    %v1850 = vpop.f32.mrf.mxu0
    %v1851 = vadd.f32 %v1837, %v1850
    %v1852 = vpop.f32.mrf.mxu0
    %v1853 = vadd.f32 %v1839, %v1852
    %1854 = vdwg.mxu0
    %1855 = vmatpush.bf16.msra.mxu0 %v1350
    %1856 = vmatpush.bf16.msra.mxu0 %v1346
    %1857 = vmatpush.bf16.msra.mxu0 %v1342
    %1858 = vmatpush.bf16.msra.mxu0 %v1338
    %1859 = vmatpush.bf16.msra.mxu0 %v1334
    %1860 = vmatpush.bf16.msra.mxu0 %v1330
    %1861 = vmatpush.bf16.msra.mxu0 %v1326
    %1862 = vmatpush.bf16.msra.mxu0 %v1322
    %1863 = vmatmul.bf16.gmra.mxu0 %v124
    %v1864 = vpop.f32.mrf.mxu0
    %v1865 = vadd.f32 %v1851, %v1864
    %v1866 = vpop.f32.mrf.mxu0
    %v1867 = vadd.f32 %v1853, %v1866
    %1868 = vdwg.mxu0
    %1869 = vmatpush.bf16.msra.mxu0 %v1382
    %1870 = vmatpush.bf16.msra.mxu0 %v1378
    %1871 = vmatpush.bf16.msra.mxu0 %v1374
    %1872 = vmatpush.bf16.msra.mxu0 %v1370
    %1873 = vmatpush.bf16.msra.mxu0 %v1366
    %1874 = vmatpush.bf16.msra.mxu0 %v1362
    %1875 = vmatpush.bf16.msra.mxu0 %v1358
    %1876 = vmatpush.bf16.msra.mxu0 %v1354
    %1877 = vmatmul.bf16.gmra.mxu0 %v125
    %v1878 = vpop.f32.mrf.mxu0
    %v1879 = vadd.f32 %v1865, %v1878
    %v1880 = vpop.f32.mrf.mxu0
    %v1881 = vadd.f32 %v1867, %v1880
    %1882 = vdwg.mxu0
    %1883 = vmatpush.bf16.msra.mxu0 %v1414
    %1884 = vmatpush.bf16.msra.mxu0 %v1410
    %1885 = vmatpush.bf16.msra.mxu0 %v1406
    %1886 = vmatpush.bf16.msra.mxu0 %v1402
    %1887 = vmatpush.bf16.msra.mxu0 %v1398
    %1888 = vmatpush.bf16.msra.mxu0 %v1394
    %1889 = vmatpush.bf16.msra.mxu0 %v1390
    %1890 = vmatpush.bf16.msra.mxu0 %v1386
    %1891 = vmatmul.bf16.gmra.mxu0 %v126
    %v1892 = vpop.f32.mrf.mxu0
    %v1893 = vadd.f32 %v1879, %v1892
    %v1894 = vpop.f32.mrf.mxu0
    %v1895 = vadd.f32 %v1881, %v1894
    %1896 = vdwg.mxu0
    %1897 = vmatpush.bf16.msra.mxu0 %v1191
    %1898 = vmatpush.bf16.msra.mxu0 %v1187
    %1899 = vmatpush.bf16.msra.mxu0 %v1183
    %1900 = vmatpush.bf16.msra.mxu0 %v1179
    %1901 = vmatpush.bf16.msra.mxu0 %v1175
    %1902 = vmatpush.bf16.msra.mxu0 %v1171
    %1903 = vmatpush.bf16.msra.mxu0 %v1167
    %1904 = vmatpush.bf16.msra.mxu0 %v1163
    %1905 = vmatmul.bf16.gmra.mxu0 %v119
    %v1906 = vpop.f32.mrf.mxu0
    %v1907 = vadd.f32 %v387, %v1906
    %v1908 = vpop.f32.mrf.mxu0
    %v1909 = vadd.f32 %v387, %v1908
    %1910 = vdwg.mxu0
    %1911 = vmatpush.bf16.msra.mxu0 %v1223
    %1912 = vmatpush.bf16.msra.mxu0 %v1219
    %1913 = vmatpush.bf16.msra.mxu0 %v1215
    %1914 = vmatpush.bf16.msra.mxu0 %v1211
    %1915 = vmatpush.bf16.msra.mxu0 %v1207
    %1916 = vmatpush.bf16.msra.mxu0 %v1203
    %1917 = vmatpush.bf16.msra.mxu0 %v1199
    %1918 = vmatpush.bf16.msra.mxu0 %v1195
    %1919 = vmatmul.bf16.gmra.mxu0 %v120
    %v1920 = vpop.f32.mrf.mxu0
    %v1921 = vadd.f32 %v1907, %v1920
    %v1922 = vpop.f32.mrf.mxu0
    %v1923 = vadd.f32 %v1909, %v1922
    %1924 = vdwg.mxu0
    %1925 = vmatpush.bf16.msra.mxu0 %v1255
    %1926 = vmatpush.bf16.msra.mxu0 %v1251
    %1927 = vmatpush.bf16.msra.mxu0 %v1247
    %1928 = vmatpush.bf16.msra.mxu0 %v1243
    %1929 = vmatpush.bf16.msra.mxu0 %v1239
    %1930 = vmatpush.bf16.msra.mxu0 %v1235
    %1931 = vmatpush.bf16.msra.mxu0 %v1231
    %1932 = vmatpush.bf16.msra.mxu0 %v1227
    %1933 = vmatmul.bf16.gmra.mxu0 %v121
    %v1934 = vpop.f32.mrf.mxu0
    %v1935 = vadd.f32 %v1921, %v1934
    %v1936 = vpop.f32.mrf.mxu0
    %v1937 = vadd.f32 %v1923, %v1936
    %1938 = vdwg.mxu0
    %1939 = vmatpush.bf16.msra.mxu0 %v1287
    %1940 = vmatpush.bf16.msra.mxu0 %v1283
    %1941 = vmatpush.bf16.msra.mxu0 %v1279
    %1942 = vmatpush.bf16.msra.mxu0 %v1275
    %1943 = vmatpush.bf16.msra.mxu0 %v1271
    %1944 = vmatpush.bf16.msra.mxu0 %v1267
    %1945 = vmatpush.bf16.msra.mxu0 %v1263
    %1946 = vmatpush.bf16.msra.mxu0 %v1259
    %1947 = vmatmul.bf16.gmra.mxu0 %v122
    %v1948 = vpop.f32.mrf.mxu0
    %v1949 = vadd.f32 %v1935, %v1948
    %v1950 = vpop.f32.mrf.mxu0
    %v1951 = vadd.f32 %v1937, %v1950
    %1952 = vdwg.mxu0
    %1953 = vmatpush.bf16.msra.mxu0 %v1319
    %1954 = vmatpush.bf16.msra.mxu0 %v1315
    %1955 = vmatpush.bf16.msra.mxu0 %v1311
    %1956 = vmatpush.bf16.msra.mxu0 %v1307
    %1957 = vmatpush.bf16.msra.mxu0 %v1303
    %1958 = vmatpush.bf16.msra.mxu0 %v1299
    %1959 = vmatpush.bf16.msra.mxu0 %v1295
    %1960 = vmatpush.bf16.msra.mxu0 %v1291
    %1961 = vmatmul.bf16.gmra.mxu0 %v123
    %v1962 = vpop.f32.mrf.mxu0
    %v1963 = vadd.f32 %v1949, %v1962
    %v1964 = vpop.f32.mrf.mxu0
    %v1965 = vadd.f32 %v1951, %v1964
    %1966 = vdwg.mxu0
    %1967 = vmatpush.bf16.msra.mxu0 %v1351
    %1968 = vmatpush.bf16.msra.mxu0 %v1347
    %1969 = vmatpush.bf16.msra.mxu0 %v1343
    %1970 = vmatpush.bf16.msra.mxu0 %v1339
    %1971 = vmatpush.bf16.msra.mxu0 %v1335
    %1972 = vmatpush.bf16.msra.mxu0 %v1331
    %1973 = vmatpush.bf16.msra.mxu0 %v1327
    %1974 = vmatpush.bf16.msra.mxu0 %v1323
    %1975 = vmatmul.bf16.gmra.mxu0 %v124
    %v1976 = vpop.f32.mrf.mxu0
    %v1977 = vadd.f32 %v1963, %v1976
    %v1978 = vpop.f32.mrf.mxu0
    %v1979 = vadd.f32 %v1965, %v1978
    %1980 = vdwg.mxu0
    %1981 = vmatpush.bf16.msra.mxu0 %v1383
    %1982 = vmatpush.bf16.msra.mxu0 %v1379
    %1983 = vmatpush.bf16.msra.mxu0 %v1375
    %1984 = vmatpush.bf16.msra.mxu0 %v1371
    %1985 = vmatpush.bf16.msra.mxu0 %v1367
    %1986 = vmatpush.bf16.msra.mxu0 %v1363
    %1987 = vmatpush.bf16.msra.mxu0 %v1359
    %1988 = vmatpush.bf16.msra.mxu0 %v1355
    %1989 = vmatmul.bf16.gmra.mxu0 %v125
    %v1990 = vpop.f32.mrf.mxu0
    %v1991 = vadd.f32 %v1977, %v1990
    %v1992 = vpop.f32.mrf.mxu0
    %v1993 = vadd.f32 %v1979, %v1992
    %1994 = vdwg.mxu0
    %1995 = vmatpush.bf16.msra.mxu0 %v1415
    %1996 = vmatpush.bf16.msra.mxu0 %v1411
    %1997 = vmatpush.bf16.msra.mxu0 %v1407
    %1998 = vmatpush.bf16.msra.mxu0 %v1403
    %1999 = vmatpush.bf16.msra.mxu0 %v1399
    %2000 = vmatpush.bf16.msra.mxu0 %v1395
    %2001 = vmatpush.bf16.msra.mxu0 %v1391
    %2002 = vmatpush.bf16.msra.mxu0 %v1387
    %2003 = vmatmul.bf16.gmra.mxu0 %v126
    %v2004 = vpop.f32.mrf.mxu0
    %v2005 = vadd.f32 %v1991, %v2004
    %v2006 = vpop.f32.mrf.mxu0
    %v2007 = vadd.f32 %v1993, %v2006
    %2008 = vdwg.mxu0
    %2009 = vmatpush.bf16.msra.mxu0 %v1192
    %2010 = vmatpush.bf16.msra.mxu0 %v1188
    %2011 = vmatpush.bf16.msra.mxu0 %v1184
    %2012 = vmatpush.bf16.msra.mxu0 %v1180
    %2013 = vmatpush.bf16.msra.mxu0 %v1176
    %2014 = vmatpush.bf16.msra.mxu0 %v1172
    %2015 = vmatpush.bf16.msra.mxu0 %v1168
    %2016 = vmatpush.bf16.msra.mxu0 %v1164
    %2017 = vmatmul.bf16.gmra.mxu0 %v119
    %v2018 = vpop.f32.mrf.mxu0
    %v2019 = vadd.f32 %v388, %v2018
    %v2020 = vpop.f32.mrf.mxu0
    %v2021 = vadd.f32 %v388, %v2020
    %2022 = vdwg.mxu0
    %2023 = vmatpush.bf16.msra.mxu0 %v1224
    %2024 = vmatpush.bf16.msra.mxu0 %v1220
    %2025 = vmatpush.bf16.msra.mxu0 %v1216
    %2026 = vmatpush.bf16.msra.mxu0 %v1212
    %2027 = vmatpush.bf16.msra.mxu0 %v1208
    %2028 = vmatpush.bf16.msra.mxu0 %v1204
    %2029 = vmatpush.bf16.msra.mxu0 %v1200
    %2030 = vmatpush.bf16.msra.mxu0 %v1196
    %2031 = vmatmul.bf16.gmra.mxu0 %v120
    %v2032 = vpop.f32.mrf.mxu0
    %v2033 = vadd.f32 %v2019, %v2032
    %v2034 = vpop.f32.mrf.mxu0
    %v2035 = vadd.f32 %v2021, %v2034
    %2036 = vdwg.mxu0
    %2037 = vmatpush.bf16.msra.mxu0 %v1256
    %2038 = vmatpush.bf16.msra.mxu0 %v1252
    %2039 = vmatpush.bf16.msra.mxu0 %v1248
    %2040 = vmatpush.bf16.msra.mxu0 %v1244
    %2041 = vmatpush.bf16.msra.mxu0 %v1240
    %2042 = vmatpush.bf16.msra.mxu0 %v1236
    %2043 = vmatpush.bf16.msra.mxu0 %v1232
    %2044 = vmatpush.bf16.msra.mxu0 %v1228
    %2045 = vmatmul.bf16.gmra.mxu0 %v121
    %v2046 = vpop.f32.mrf.mxu0
    %v2047 = vadd.f32 %v2033, %v2046
    %v2048 = vpop.f32.mrf.mxu0
    %v2049 = vadd.f32 %v2035, %v2048
    %2050 = vdwg.mxu0
    %2051 = vmatpush.bf16.msra.mxu0 %v1288
    %2052 = vmatpush.bf16.msra.mxu0 %v1284
    %2053 = vmatpush.bf16.msra.mxu0 %v1280
    %2054 = vmatpush.bf16.msra.mxu0 %v1276
    %2055 = vmatpush.bf16.msra.mxu0 %v1272
    %2056 = vmatpush.bf16.msra.mxu0 %v1268
    %2057 = vmatpush.bf16.msra.mxu0 %v1264
    %2058 = vmatpush.bf16.msra.mxu0 %v1260
    %2059 = vmatmul.bf16.gmra.mxu0 %v122
    %v2060 = vpop.f32.mrf.mxu0
    %v2061 = vadd.f32 %v2047, %v2060
    %v2062 = vpop.f32.mrf.mxu0
    %v2063 = vadd.f32 %v2049, %v2062
    %2064 = vdwg.mxu0
    %2065 = vmatpush.bf16.msra.mxu0 %v1320
    %2066 = vmatpush.bf16.msra.mxu0 %v1316
    %2067 = vmatpush.bf16.msra.mxu0 %v1312
    %2068 = vmatpush.bf16.msra.mxu0 %v1308
    %2069 = vmatpush.bf16.msra.mxu0 %v1304
    %2070 = vmatpush.bf16.msra.mxu0 %v1300
    %2071 = vmatpush.bf16.msra.mxu0 %v1296
    %2072 = vmatpush.bf16.msra.mxu0 %v1292
    %2073 = vmatmul.bf16.gmra.mxu0 %v123
    %v2074 = vpop.f32.mrf.mxu0
    %v2075 = vadd.f32 %v2061, %v2074
    %v2076 = vpop.f32.mrf.mxu0
    %v2077 = vadd.f32 %v2063, %v2076
    %2078 = vdwg.mxu0
    %2079 = vmatpush.bf16.msra.mxu0 %v1352
    %2080 = vmatpush.bf16.msra.mxu0 %v1348
    %2081 = vmatpush.bf16.msra.mxu0 %v1344
    %2082 = vmatpush.bf16.msra.mxu0 %v1340
    %2083 = vmatpush.bf16.msra.mxu0 %v1336
    %2084 = vmatpush.bf16.msra.mxu0 %v1332
    %2085 = vmatpush.bf16.msra.mxu0 %v1328
    %2086 = vmatpush.bf16.msra.mxu0 %v1324
    %2087 = vmatmul.bf16.gmra.mxu0 %v124
    %v2088 = vpop.f32.mrf.mxu0
    %v2089 = vadd.f32 %v2075, %v2088
    %v2090 = vpop.f32.mrf.mxu0
    %v2091 = vadd.f32 %v2077, %v2090
    %2092 = vdwg.mxu0
    %2093 = vmatpush.bf16.msra.mxu0 %v1384
    %2094 = vmatpush.bf16.msra.mxu0 %v1380
    %2095 = vmatpush.bf16.msra.mxu0 %v1376
    %2096 = vmatpush.bf16.msra.mxu0 %v1372
    %2097 = vmatpush.bf16.msra.mxu0 %v1368
    %2098 = vmatpush.bf16.msra.mxu0 %v1364
    %2099 = vmatpush.bf16.msra.mxu0 %v1360
    %2100 = vmatpush.bf16.msra.mxu0 %v1356
    %2101 = vmatmul.bf16.gmra.mxu0 %v125
    %v2102 = vpop.f32.mrf.mxu0
    %v2103 = vadd.f32 %v2089, %v2102
    %v2104 = vpop.f32.mrf.mxu0
    %v2105 = vadd.f32 %v2091, %v2104
    %2106 = vdwg.mxu0
    %2107 = vmatpush.bf16.msra.mxu0 %v1416
    %2108 = vmatpush.bf16.msra.mxu0 %v1412
    %2109 = vmatpush.bf16.msra.mxu0 %v1408
    %2110 = vmatpush.bf16.msra.mxu0 %v1404
    %2111 = vmatpush.bf16.msra.mxu0 %v1400
    %2112 = vmatpush.bf16.msra.mxu0 %v1396
    %2113 = vmatpush.bf16.msra.mxu0 %v1392
    %2114 = vmatpush.bf16.msra.mxu0 %v1388
    %2115 = vmatmul.bf16.gmra.mxu0 %v126
    %v2116 = vpop.f32.mrf.mxu0
    %v2117 = vadd.f32 %v2103, %v2116
    %v2118 = vpop.f32.mrf.mxu0
    %v2119 = vadd.f32 %v2105, %v2118
    %2120 = vdwg.mxu0
    %vm2121 = vcmp.ge.f32.partialorder %v1781, 0.0
    %vm2122 = vcmp.ge.f32.partialorder %v1893, 0.0
    %vm2123 = vcmp.ge.f32.partialorder %v2005, 0.0
    %vm2124 = vcmp.ge.f32.partialorder %v2117, 0.0
    %vm2125 = vcmp.ge.f32.partialorder %v1783, 0.0
    %vm2126 = vcmp.ge.f32.partialorder %v1895, 0.0
    %vm2127 = vcmp.ge.f32.partialorder %v2007, 0.0
    %vm2128 = vcmp.ge.f32.partialorder %v2119, 0.0
    %v2129 = vmul.f32 %v1781, 0.2
    %v2130 = vmul.f32 %v1893, 0.2
    %v2131 = vmul.f32 %v2005, 0.2
    %v2132 = vmul.f32 %v2117, 0.2
    %v2133 = vmul.f32 %v1783, 0.2
    %v2134 = vmul.f32 %v1895, 0.2
    %v2135 = vmul.f32 %v2007, 0.2
    %v2136 = vmul.f32 %v2119, 0.2
    %v2137 = vsel %vm2121, %v1781, %v2129
    %v2138 = vsel %vm2122, %v1893, %v2130
    %v2139 = vsel %vm2123, %v2005, %v2131
    %v2140 = vsel %vm2124, %v2117, %v2132
    %v2141 = vsel %vm2125, %v1783, %v2133
    %v2142 = vsel %vm2126, %v1895, %v2134
    %v2143 = vsel %vm2127, %v2007, %v2135
    %v2144 = vsel %vm2128, %v2119, %v2136
    %v2145 = vpack.c.bf16 %v2141, %v2137
    %v2146 = vpack.c.bf16 %v2142, %v2138
    %v2147 = vpack.c.bf16 %v2143, %v2139
    %v2148 = vpack.c.bf16 %v2144, %v2140
    %v2149 = vld [vmem:[#allocation8] sm:$0xff]
    %v2150 = vld [vmem:[#allocation8 + $0x8] sm:$0xff]
    %v2151 = vld [vmem:[#allocation8 + $0x10] sm:$0xff]
    %v2152 = vld [vmem:[#allocation8 + $0x18] sm:$0xff]
    %v2153 = vld [vmem:[#allocation8 + $0x20] sm:$0xff]
    %v2154 = vld [vmem:[#allocation8 + $0x28] sm:$0xff]
    %v2155 = vld [vmem:[#allocation8 + $0x30] sm:$0xff]
    %v2156 = vld [vmem:[#allocation8 + $0x38] sm:$0xff]
    %v2157 = vld [vmem:[#allocation8 + $0x40] sm:$0xff]
    %v2158 = vld [vmem:[#allocation8 + $0x48] sm:$0xff]
    %v2159 = vld [vmem:[#allocation8 + $0x50] sm:$0xff]
    %v2160 = vld [vmem:[#allocation8 + $0x58] sm:$0xff]
    %v2161 = vld [vmem:[#allocation8 + $0x60] sm:$0xff]
    %v2162 = vld [vmem:[#allocation8 + $0x68] sm:$0xff]
    %v2163 = vld [vmem:[#allocation8 + $0x70] sm:$0xff]
    %v2164 = vld [vmem:[#allocation8 + $0x78] sm:$0xff]
    %v2165 = vld [vmem:[#allocation8 + $0x80] sm:$0xff]
    %v2166 = vld [vmem:[#allocation8 + $0x88] sm:$0xff]
    %v2167 = vld [vmem:[#allocation8 + $0x90] sm:$0xff]
    %v2168 = vld [vmem:[#allocation8 + $0x98] sm:$0xff]
    %v2169 = vld [vmem:[#allocation8 + $0xa0] sm:$0xff]
    %v2170 = vld [vmem:[#allocation8 + $0xa8] sm:$0xff]
    %v2171 = vld [vmem:[#allocation8 + $0xb0] sm:$0xff]
    %v2172 = vld [vmem:[#allocation8 + $0xb8] sm:$0xff]
    %v2173 = vld [vmem:[#allocation8 + $0xc0] sm:$0xff]
    %v2174 = vld [vmem:[#allocation8 + $0xc8] sm:$0xff]
    %v2175 = vld [vmem:[#allocation8 + $0xd0] sm:$0xff]
    %v2176 = vld [vmem:[#allocation8 + $0xd8] sm:$0xff]
    %v2177 = vld [vmem:[#allocation8 + $0xe0] sm:$0xff]
    %v2178 = vld [vmem:[#allocation8 + $0xe8] sm:$0xff]
    %v2179 = vld [vmem:[#allocation8 + $0xf0] sm:$0xff]
    %v2180 = vld [vmem:[#allocation8 + $0xf8] sm:$0xff]
    %v2181 = vld [vmem:[#allocation8 + $0x100] sm:$0xff]
    %v2182 = vld [vmem:[#allocation8 + $0x108] sm:$0xff]
    %v2183 = vld [vmem:[#allocation8 + $0x110] sm:$0xff]
    %v2184 = vld [vmem:[#allocation8 + $0x118] sm:$0xff]
    %v2185 = vld [vmem:[#allocation8 + $0x120] sm:$0xff]
    %v2186 = vld [vmem:[#allocation8 + $0x128] sm:$0xff]
    %v2187 = vld [vmem:[#allocation8 + $0x130] sm:$0xff]
    %v2188 = vld [vmem:[#allocation8 + $0x138] sm:$0xff]
    %v2189 = vld [vmem:[#allocation8 + $0x140] sm:$0xff]
    %v2190 = vld [vmem:[#allocation8 + $0x148] sm:$0xff]
    %v2191 = vld [vmem:[#allocation8 + $0x150] sm:$0xff]
    %v2192 = vld [vmem:[#allocation8 + $0x158] sm:$0xff]
    %v2193 = vld [vmem:[#allocation8 + $0x160] sm:$0xff]
    %v2194 = vld [vmem:[#allocation8 + $0x168] sm:$0xff]
    %v2195 = vld [vmem:[#allocation8 + $0x170] sm:$0xff]
    %v2196 = vld [vmem:[#allocation8 + $0x178] sm:$0xff]
    %v2197 = vld [vmem:[#allocation8 + $0x180] sm:$0xff]
    %v2198 = vld [vmem:[#allocation8 + $0x188] sm:$0xff]
    %v2199 = vld [vmem:[#allocation8 + $0x190] sm:$0xff]
    %v2200 = vld [vmem:[#allocation8 + $0x198] sm:$0xff]
    %v2201 = vld [vmem:[#allocation8 + $0x1a0] sm:$0xff]
    %v2202 = vld [vmem:[#allocation8 + $0x1a8] sm:$0xff]
    %v2203 = vld [vmem:[#allocation8 + $0x1b0] sm:$0xff]
    %v2204 = vld [vmem:[#allocation8 + $0x1b8] sm:$0xff]
    %v2205 = vld [vmem:[#allocation8 + $0x1c0] sm:$0xff]
    %v2206 = vld [vmem:[#allocation8 + $0x1c8] sm:$0xff]
    %v2207 = vld [vmem:[#allocation8 + $0x1d0] sm:$0xff]
    %v2208 = vld [vmem:[#allocation8 + $0x1d8] sm:$0xff]
    %v2209 = vld [vmem:[#allocation8 + $0x1e0] sm:$0xff]
    %v2210 = vld [vmem:[#allocation8 + $0x1e8] sm:$0xff]
    %v2211 = vld [vmem:[#allocation8 + $0x1f0] sm:$0xff]
    %v2212 = vld [vmem:[#allocation8 + $0x1f8] sm:$0xff]
    %v2213 = vld [vmem:[%s4] sm:$0x3]
    %v2215 = vperm.slane %v2213, 0
    %v2216 = vperm.slane %v2213, 1
    %v2283 = vunpack.c.l.b16 %v2149
    %v2284 = vunpack.c.h.b16 %v2149
    %v2285 = vunpack.c.l.b16 %v2150
    %v2286 = vunpack.c.h.b16 %v2150
    %v2287 = vunpack.c.l.b16 %v2151
    %v2288 = vunpack.c.h.b16 %v2151
    %v2289 = vunpack.c.l.b16 %v2152
    %v2290 = vunpack.c.h.b16 %v2152
    %v2291 = vunpack.c.l.b16 %v2153
    %v2292 = vunpack.c.h.b16 %v2153
    %v2293 = vunpack.c.l.b16 %v2154
    %v2294 = vunpack.c.h.b16 %v2154
    %v2295 = vunpack.c.l.b16 %v2155
    %v2296 = vunpack.c.h.b16 %v2155
    %v2297 = vunpack.c.l.b16 %v2156
    %v2298 = vunpack.c.h.b16 %v2156
    %v2299 = vunpack.c.l.b16 %v2157
    %v2300 = vunpack.c.h.b16 %v2157
    %v2301 = vunpack.c.l.b16 %v2158
    %v2302 = vunpack.c.h.b16 %v2158
    %v2303 = vunpack.c.l.b16 %v2159
    %v2304 = vunpack.c.h.b16 %v2159
    %v2305 = vunpack.c.l.b16 %v2160
    %v2306 = vunpack.c.h.b16 %v2160
    %v2307 = vunpack.c.l.b16 %v2161
    %v2308 = vunpack.c.h.b16 %v2161
    %v2309 = vunpack.c.l.b16 %v2162
    %v2310 = vunpack.c.h.b16 %v2162
    %v2311 = vunpack.c.l.b16 %v2163
    %v2312 = vunpack.c.h.b16 %v2163
    %v2313 = vunpack.c.l.b16 %v2164
    %v2314 = vunpack.c.h.b16 %v2164
    %v2315 = vunpack.c.l.b16 %v2165
    %v2316 = vunpack.c.h.b16 %v2165
    %v2317 = vunpack.c.l.b16 %v2166
    %v2318 = vunpack.c.h.b16 %v2166
    %v2319 = vunpack.c.l.b16 %v2167
    %v2320 = vunpack.c.h.b16 %v2167
    %v2321 = vunpack.c.l.b16 %v2168
    %v2322 = vunpack.c.h.b16 %v2168
    %v2323 = vunpack.c.l.b16 %v2169
    %v2324 = vunpack.c.h.b16 %v2169
    %v2325 = vunpack.c.l.b16 %v2170
    %v2326 = vunpack.c.h.b16 %v2170
    %v2327 = vunpack.c.l.b16 %v2171
    %v2328 = vunpack.c.h.b16 %v2171
    %v2329 = vunpack.c.l.b16 %v2172
    %v2330 = vunpack.c.h.b16 %v2172
    %v2331 = vunpack.c.l.b16 %v2173
    %v2332 = vunpack.c.h.b16 %v2173
    %v2333 = vunpack.c.l.b16 %v2174
    %v2334 = vunpack.c.h.b16 %v2174
    %v2335 = vunpack.c.l.b16 %v2175
    %v2336 = vunpack.c.h.b16 %v2175
    %v2337 = vunpack.c.l.b16 %v2176
    %v2338 = vunpack.c.h.b16 %v2176
    %v2339 = vunpack.c.l.b16 %v2177
    %v2340 = vunpack.c.h.b16 %v2177
    %v2341 = vunpack.c.l.b16 %v2178
    %v2342 = vunpack.c.h.b16 %v2178
    %v2343 = vunpack.c.l.b16 %v2179
    %v2344 = vunpack.c.h.b16 %v2179
    %v2345 = vunpack.c.l.b16 %v2180
    %v2346 = vunpack.c.h.b16 %v2180
    %v2347 = vunpack.c.l.b16 %v2181
    %v2348 = vunpack.c.h.b16 %v2181
    %v2349 = vunpack.c.l.b16 %v2182
    %v2350 = vunpack.c.h.b16 %v2182
    %v2351 = vunpack.c.l.b16 %v2183
    %v2352 = vunpack.c.h.b16 %v2183
    %v2353 = vunpack.c.l.b16 %v2184
    %v2354 = vunpack.c.h.b16 %v2184
    %v2355 = vunpack.c.l.b16 %v2185
    %v2356 = vunpack.c.h.b16 %v2185
    %v2357 = vunpack.c.l.b16 %v2186
    %v2358 = vunpack.c.h.b16 %v2186
    %v2359 = vunpack.c.l.b16 %v2187
    %v2360 = vunpack.c.h.b16 %v2187
    %v2361 = vunpack.c.l.b16 %v2188
    %v2362 = vunpack.c.h.b16 %v2188
    %v2363 = vunpack.c.l.b16 %v2189
    %v2364 = vunpack.c.h.b16 %v2189
    %v2365 = vunpack.c.l.b16 %v2190
    %v2366 = vunpack.c.h.b16 %v2190
    %v2367 = vunpack.c.l.b16 %v2191
    %v2368 = vunpack.c.h.b16 %v2191
    %v2369 = vunpack.c.l.b16 %v2192
    %v2370 = vunpack.c.h.b16 %v2192
    %v2371 = vunpack.c.l.b16 %v2193
    %v2372 = vunpack.c.h.b16 %v2193
    %v2373 = vunpack.c.l.b16 %v2194
    %v2374 = vunpack.c.h.b16 %v2194
    %v2375 = vunpack.c.l.b16 %v2195
    %v2376 = vunpack.c.h.b16 %v2195
    %v2377 = vunpack.c.l.b16 %v2196
    %v2378 = vunpack.c.h.b16 %v2196
    %v2379 = vunpack.c.l.b16 %v2197
    %v2380 = vunpack.c.h.b16 %v2197
    %v2381 = vunpack.c.l.b16 %v2198
    %v2382 = vunpack.c.h.b16 %v2198
    %v2383 = vunpack.c.l.b16 %v2199
    %v2384 = vunpack.c.h.b16 %v2199
    %v2385 = vunpack.c.l.b16 %v2200
    %v2386 = vunpack.c.h.b16 %v2200
    %v2387 = vunpack.c.l.b16 %v2201
    %v2388 = vunpack.c.h.b16 %v2201
    %v2389 = vunpack.c.l.b16 %v2202
    %v2390 = vunpack.c.h.b16 %v2202
    %v2391 = vunpack.c.l.b16 %v2203
    %v2392 = vunpack.c.h.b16 %v2203
    %v2393 = vunpack.c.l.b16 %v2204
    %v2394 = vunpack.c.h.b16 %v2204
    %v2395 = vunpack.c.l.b16 %v2205
    %v2396 = vunpack.c.h.b16 %v2205
    %v2397 = vunpack.c.l.b16 %v2206
    %v2398 = vunpack.c.h.b16 %v2206
    %v2399 = vunpack.c.l.b16 %v2207
    %v2400 = vunpack.c.h.b16 %v2207
    %v2401 = vunpack.c.l.b16 %v2208
    %v2402 = vunpack.c.h.b16 %v2208
    %v2403 = vunpack.c.l.b16 %v2209
    %v2404 = vunpack.c.h.b16 %v2209
    %v2405 = vunpack.c.l.b16 %v2210
    %v2406 = vunpack.c.h.b16 %v2210
    %v2407 = vunpack.c.l.b16 %v2211
    %v2408 = vunpack.c.h.b16 %v2211
    %v2409 = vunpack.c.l.b16 %v2212
    %v2410 = vunpack.c.h.b16 %v2212
    %v2411 = vpack.c.b16 %v2285, %v2283
    %v2412 = vpack.c.b16 %v2286, %v2284
    %v2413 = vpack.c.b16 %v2289, %v2287
    %v2414 = vpack.c.b16 %v2290, %v2288
    %v2415 = vpack.c.b16 %v2293, %v2291
    %v2416 = vpack.c.b16 %v2294, %v2292
    %v2417 = vpack.c.b16 %v2297, %v2295
    %v2418 = vpack.c.b16 %v2298, %v2296
    %v2419 = vpack.c.b16 %v2301, %v2299
    %v2420 = vpack.c.b16 %v2302, %v2300
    %v2421 = vpack.c.b16 %v2305, %v2303
    %v2422 = vpack.c.b16 %v2306, %v2304
    %v2423 = vpack.c.b16 %v2309, %v2307
    %v2424 = vpack.c.b16 %v2310, %v2308
    %v2425 = vpack.c.b16 %v2313, %v2311
    %v2426 = vpack.c.b16 %v2314, %v2312
    %v2427 = vpack.c.b16 %v2317, %v2315
    %v2428 = vpack.c.b16 %v2318, %v2316
    %v2429 = vpack.c.b16 %v2321, %v2319
    %v2430 = vpack.c.b16 %v2322, %v2320
    %v2431 = vpack.c.b16 %v2325, %v2323
    %v2432 = vpack.c.b16 %v2326, %v2324
    %v2433 = vpack.c.b16 %v2329, %v2327
    %v2434 = vpack.c.b16 %v2330, %v2328
    %v2435 = vpack.c.b16 %v2333, %v2331
    %v2436 = vpack.c.b16 %v2334, %v2332
    %v2437 = vpack.c.b16 %v2337, %v2335
    %v2438 = vpack.c.b16 %v2338, %v2336
    %v2439 = vpack.c.b16 %v2341, %v2339
    %v2440 = vpack.c.b16 %v2342, %v2340
    %v2441 = vpack.c.b16 %v2345, %v2343
    %v2442 = vpack.c.b16 %v2346, %v2344
    %v2443 = vpack.c.b16 %v2349, %v2347
    %v2444 = vpack.c.b16 %v2350, %v2348
    %v2445 = vpack.c.b16 %v2353, %v2351
    %v2446 = vpack.c.b16 %v2354, %v2352
    %v2447 = vpack.c.b16 %v2357, %v2355
    %v2448 = vpack.c.b16 %v2358, %v2356
    %v2449 = vpack.c.b16 %v2361, %v2359
    %v2450 = vpack.c.b16 %v2362, %v2360
    %v2451 = vpack.c.b16 %v2365, %v2363
    %v2452 = vpack.c.b16 %v2366, %v2364
    %v2453 = vpack.c.b16 %v2369, %v2367
    %v2454 = vpack.c.b16 %v2370, %v2368
    %v2455 = vpack.c.b16 %v2373, %v2371
    %v2456 = vpack.c.b16 %v2374, %v2372
    %v2457 = vpack.c.b16 %v2377, %v2375
    %v2458 = vpack.c.b16 %v2378, %v2376
    %v2459 = vpack.c.b16 %v2381, %v2379
    %v2460 = vpack.c.b16 %v2382, %v2380
    %v2461 = vpack.c.b16 %v2385, %v2383
    %v2462 = vpack.c.b16 %v2386, %v2384
    %v2463 = vpack.c.b16 %v2389, %v2387
    %v2464 = vpack.c.b16 %v2390, %v2388
    %v2465 = vpack.c.b16 %v2393, %v2391
    %v2466 = vpack.c.b16 %v2394, %v2392
    %v2467 = vpack.c.b16 %v2397, %v2395
    %v2468 = vpack.c.b16 %v2398, %v2396
    %v2469 = vpack.c.b16 %v2401, %v2399
    %v2470 = vpack.c.b16 %v2402, %v2400
    %v2471 = vpack.c.b16 %v2405, %v2403
    %v2472 = vpack.c.b16 %v2406, %v2404
    %v2473 = vpack.c.b16 %v2409, %v2407
    %v2474 = vpack.c.b16 %v2410, %v2408
    %2539 = vmatpush.bf16.msra.mxu0 %v2425
    %2540 = vmatpush.bf16.msra.mxu0 %v2423
    %2541 = vmatpush.bf16.msra.mxu0 %v2421
    %2542 = vmatpush.bf16.msra.mxu0 %v2419
    %2543 = vmatpush.bf16.msra.mxu0 %v2417
    %2544 = vmatpush.bf16.msra.mxu0 %v2415
    %2545 = vmatpush.bf16.msra.mxu0 %v2413
    %2546 = vmatpush.bf16.msra.mxu0 %v2411
    %2547 = vmatmul.bf16.gmra.mxu0 %v2145
    %v2548 = vpop.f32.mrf.mxu0
    %v2549 = vadd.f32 %v2215, %v2548
    %v2550 = vpop.f32.mrf.mxu0
    %v2551 = vadd.f32 %v2215, %v2550
    %2552 = vdwg.mxu0
    %2553 = vmatpush.bf16.msra.mxu0 %v2441
    %2554 = vmatpush.bf16.msra.mxu0 %v2439
    %2555 = vmatpush.bf16.msra.mxu0 %v2437
    %2556 = vmatpush.bf16.msra.mxu0 %v2435
    %2557 = vmatpush.bf16.msra.mxu0 %v2433
    %2558 = vmatpush.bf16.msra.mxu0 %v2431
    %2559 = vmatpush.bf16.msra.mxu0 %v2429
    %2560 = vmatpush.bf16.msra.mxu0 %v2427
    %2561 = vmatmul.bf16.gmra.mxu0 %v2146
    %v2562 = vpop.f32.mrf.mxu0
    %v2563 = vadd.f32 %v2549, %v2562
    %v2564 = vpop.f32.mrf.mxu0
    %v2565 = vadd.f32 %v2551, %v2564
    %2566 = vdwg.mxu0
    %2567 = vmatpush.bf16.msra.mxu0 %v2457
    %2568 = vmatpush.bf16.msra.mxu0 %v2455
    %2569 = vmatpush.bf16.msra.mxu0 %v2453
    %2570 = vmatpush.bf16.msra.mxu0 %v2451
    %2571 = vmatpush.bf16.msra.mxu0 %v2449
    %2572 = vmatpush.bf16.msra.mxu0 %v2447
    %2573 = vmatpush.bf16.msra.mxu0 %v2445
    %2574 = vmatpush.bf16.msra.mxu0 %v2443
    %2575 = vmatmul.bf16.gmra.mxu0 %v2147
    %v2576 = vpop.f32.mrf.mxu0
    %v2577 = vadd.f32 %v2563, %v2576
    %v2578 = vpop.f32.mrf.mxu0
    %v2579 = vadd.f32 %v2565, %v2578
    %2580 = vdwg.mxu0
    %2581 = vmatpush.bf16.msra.mxu0 %v2473
    %2582 = vmatpush.bf16.msra.mxu0 %v2471
    %2583 = vmatpush.bf16.msra.mxu0 %v2469
    %2584 = vmatpush.bf16.msra.mxu0 %v2467
    %2585 = vmatpush.bf16.msra.mxu0 %v2465
    %2586 = vmatpush.bf16.msra.mxu0 %v2463
    %2587 = vmatpush.bf16.msra.mxu0 %v2461
    %2588 = vmatpush.bf16.msra.mxu0 %v2459
    %2589 = vmatmul.bf16.gmra.mxu0 %v2148
    %v2590 = vpop.f32.mrf.mxu0
    %v2591 = vadd.f32 %v2577, %v2590
    %v2592 = vpop.f32.mrf.mxu0
    %v2593 = vadd.f32 %v2579, %v2592
    %2594 = vdwg.mxu0
    %2595 = vmatpush.bf16.msra.mxu0 %v2426
    %2596 = vmatpush.bf16.msra.mxu0 %v2424
    %2597 = vmatpush.bf16.msra.mxu0 %v2422
    %2598 = vmatpush.bf16.msra.mxu0 %v2420
    %2599 = vmatpush.bf16.msra.mxu0 %v2418
    %2600 = vmatpush.bf16.msra.mxu0 %v2416
    %2601 = vmatpush.bf16.msra.mxu0 %v2414
    %2602 = vmatpush.bf16.msra.mxu0 %v2412
    %2603 = vmatmul.bf16.gmra.mxu0 %v2145
    %v2604 = vpop.f32.mrf.mxu0
    %v2605 = vadd.f32 %v2216, %v2604
    %v2606 = vpop.f32.mrf.mxu0
    %v2607 = vadd.f32 %v2216, %v2606
    %2608 = vdwg.mxu0
    %2609 = vmatpush.bf16.msra.mxu0 %v2442
    %2610 = vmatpush.bf16.msra.mxu0 %v2440
    %2611 = vmatpush.bf16.msra.mxu0 %v2438
    %2612 = vmatpush.bf16.msra.mxu0 %v2436
    %2613 = vmatpush.bf16.msra.mxu0 %v2434
    %2614 = vmatpush.bf16.msra.mxu0 %v2432
    %2615 = vmatpush.bf16.msra.mxu0 %v2430
    %2616 = vmatpush.bf16.msra.mxu0 %v2428
    %2617 = vmatmul.bf16.gmra.mxu0 %v2146
    %v2618 = vpop.f32.mrf.mxu0
    %v2619 = vadd.f32 %v2605, %v2618
    %v2620 = vpop.f32.mrf.mxu0
    %v2621 = vadd.f32 %v2607, %v2620
    %2622 = vdwg.mxu0
    %2623 = vmatpush.bf16.msra.mxu0 %v2458
    %2624 = vmatpush.bf16.msra.mxu0 %v2456
    %2625 = vmatpush.bf16.msra.mxu0 %v2454
    %2626 = vmatpush.bf16.msra.mxu0 %v2452
    %2627 = vmatpush.bf16.msra.mxu0 %v2450
    %2628 = vmatpush.bf16.msra.mxu0 %v2448
    %2629 = vmatpush.bf16.msra.mxu0 %v2446
    %2630 = vmatpush.bf16.msra.mxu0 %v2444
    %2631 = vmatmul.bf16.gmra.mxu0 %v2147
    %v2632 = vpop.f32.mrf.mxu0
    %v2633 = vadd.f32 %v2619, %v2632
    %v2634 = vpop.f32.mrf.mxu0
    %v2635 = vadd.f32 %v2621, %v2634
    %2636 = vdwg.mxu0
    %2637 = vmatpush.bf16.msra.mxu0 %v2474
    %2638 = vmatpush.bf16.msra.mxu0 %v2472
    %2639 = vmatpush.bf16.msra.mxu0 %v2470
    %2640 = vmatpush.bf16.msra.mxu0 %v2468
    %2641 = vmatpush.bf16.msra.mxu0 %v2466
    %2642 = vmatpush.bf16.msra.mxu0 %v2464
    %2643 = vmatpush.bf16.msra.mxu0 %v2462
    %2644 = vmatpush.bf16.msra.mxu0 %v2460
    %2645 = vmatmul.bf16.gmra.mxu0 %v2148
    %v2646 = vpop.f32.mrf.mxu0
    %v2647 = vadd.f32 %v2633, %v2646
    %v2648 = vpop.f32.mrf.mxu0
    %v2649 = vadd.f32 %v2635, %v2648
    %2650 = vdwg.mxu0
    %vm2651 = vcmp.ge.f32.partialorder %v2591, 0.0
    %vm2652 = vcmp.ge.f32.partialorder %v2647, 0.0
    %vm2653 = vcmp.ge.f32.partialorder %v2593, 0.0
    %vm2654 = vcmp.ge.f32.partialorder %v2649, 0.0
    %v2655 = vmul.f32 %v2591, 0.2
    %v2656 = vmul.f32 %v2647, 0.2
    %v2657 = vmul.f32 %v2593, 0.2
    %v2658 = vmul.f32 %v2649, 0.2
    %v2659 = vsel %vm2651, %v2591, %v2655
    %v2660 = vsel %vm2652, %v2647, %v2656
    %v2661 = vsel %vm2653, %v2593, %v2657
    %v2662 = vsel %vm2654, %v2649, %v2658
    %v2663 = vpack.c.bf16 %v2661, %v2659
    %v2664 = vpack.c.bf16 %v2662, %v2660
    %v2665 = vld [vmem:[#allocation10] sm:$0xf]
    %v2666 = vld [vmem:[#allocation10 + $0x4] sm:$0xf]
    %v2667 = vld [vmem:[#allocation10 + $0x8] sm:$0xf]
    %v2668 = vld [vmem:[#allocation10 + $0xc] sm:$0xf]
    %v2669 = vld [vmem:[#allocation10 + $0x10] sm:$0xf]
    %v2670 = vld [vmem:[#allocation10 + $0x14] sm:$0xf]
    %v2671 = vld [vmem:[#allocation10 + $0x18] sm:$0xf]
    %v2672 = vld [vmem:[#allocation10 + $0x1c] sm:$0xf]
    %v2673 = vld [vmem:[#allocation10 + $0x20] sm:$0xf]
    %v2674 = vld [vmem:[#allocation10 + $0x24] sm:$0xf]
    %v2675 = vld [vmem:[#allocation10 + $0x28] sm:$0xf]
    %v2676 = vld [vmem:[#allocation10 + $0x2c] sm:$0xf]
    %v2677 = vld [vmem:[#allocation10 + $0x30] sm:$0xf]
    %v2678 = vld [vmem:[#allocation10 + $0x34] sm:$0xf]
    %v2679 = vld [vmem:[#allocation10 + $0x38] sm:$0xf]
    %v2680 = vld [vmem:[#allocation10 + $0x3c] sm:$0xf]
    %v2681 = vld [vmem:[#allocation10 + $0x40] sm:$0xf]
    %v2682 = vld [vmem:[#allocation10 + $0x44] sm:$0xf]
    %v2683 = vld [vmem:[#allocation10 + $0x48] sm:$0xf]
    %v2684 = vld [vmem:[#allocation10 + $0x4c] sm:$0xf]
    %v2685 = vld [vmem:[#allocation10 + $0x50] sm:$0xf]
    %v2686 = vld [vmem:[#allocation10 + $0x54] sm:$0xf]
    %v2687 = vld [vmem:[#allocation10 + $0x58] sm:$0xf]
    %v2688 = vld [vmem:[#allocation10 + $0x5c] sm:$0xf]
    %v2689 = vld [vmem:[#allocation10 + $0x60] sm:$0xf]
    %v2690 = vld [vmem:[#allocation10 + $0x64] sm:$0xf]
    %v2691 = vld [vmem:[#allocation10 + $0x68] sm:$0xf]
    %v2692 = vld [vmem:[#allocation10 + $0x6c] sm:$0xf]
    %v2693 = vld [vmem:[#allocation10 + $0x70] sm:$0xf]
    %v2694 = vld [vmem:[#allocation10 + $0x74] sm:$0xf]
    %v2695 = vld [vmem:[#allocation10 + $0x78] sm:$0xf]
    %v2696 = vld [vmem:[#allocation10 + $0x7c] sm:$0xf]
    %v2697 = vld [vmem:[%s6] sm:$0x1]
    %v2699 = vperm.slane %v2697, 0
    %v2733 = vunpack.c.l.b16 %v2665
    %v2734 = vunpack.c.l.b16 %v2666
    %v2735 = vunpack.c.l.b16 %v2667
    %v2736 = vunpack.c.l.b16 %v2668
    %v2737 = vunpack.c.l.b16 %v2669
    %v2738 = vunpack.c.l.b16 %v2670
    %v2739 = vunpack.c.l.b16 %v2671
    %v2740 = vunpack.c.l.b16 %v2672
    %v2741 = vunpack.c.l.b16 %v2673
    %v2742 = vunpack.c.l.b16 %v2674
    %v2743 = vunpack.c.l.b16 %v2675
    %v2744 = vunpack.c.l.b16 %v2676
    %v2745 = vunpack.c.l.b16 %v2677
    %v2746 = vunpack.c.l.b16 %v2678
    %v2747 = vunpack.c.l.b16 %v2679
    %v2748 = vunpack.c.l.b16 %v2680
    %v2749 = vunpack.c.l.b16 %v2681
    %v2750 = vunpack.c.l.b16 %v2682
    %v2751 = vunpack.c.l.b16 %v2683
    %v2752 = vunpack.c.l.b16 %v2684
    %v2753 = vunpack.c.l.b16 %v2685
    %v2754 = vunpack.c.l.b16 %v2686
    %v2755 = vunpack.c.l.b16 %v2687
    %v2756 = vunpack.c.l.b16 %v2688
    %v2757 = vunpack.c.l.b16 %v2689
    %v2758 = vunpack.c.l.b16 %v2690
    %v2759 = vunpack.c.l.b16 %v2691
    %v2760 = vunpack.c.l.b16 %v2692
    %v2761 = vunpack.c.l.b16 %v2693
    %v2762 = vunpack.c.l.b16 %v2694
    %v2763 = vunpack.c.l.b16 %v2695
    %v2764 = vunpack.c.l.b16 %v2696
    %v2765 = vpack.c.b16 %v2734, %v2733
    %v2766 = vpack.c.b16 %v2736, %v2735
    %v2767 = vpack.c.b16 %v2738, %v2737
    %v2768 = vpack.c.b16 %v2740, %v2739
    %v2769 = vpack.c.b16 %v2742, %v2741
    %v2770 = vpack.c.b16 %v2744, %v2743
    %v2771 = vpack.c.b16 %v2746, %v2745
    %v2772 = vpack.c.b16 %v2748, %v2747
    %v2773 = vpack.c.b16 %v2750, %v2749
    %v2774 = vpack.c.b16 %v2752, %v2751
    %v2775 = vpack.c.b16 %v2754, %v2753
    %v2776 = vpack.c.b16 %v2756, %v2755
    %v2777 = vpack.c.b16 %v2758, %v2757
    %v2778 = vpack.c.b16 %v2760, %v2759
    %v2779 = vpack.c.b16 %v2762, %v2761
    %v2780 = vpack.c.b16 %v2764, %v2763
    %2797 = vmatpush.bf16.msra.mxu0 %v2772
    %2798 = vmatpush.bf16.msra.mxu0 %v2771
    %2799 = vmatpush.bf16.msra.mxu0 %v2770
    %2800 = vmatpush.bf16.msra.mxu0 %v2769
    %2801 = vmatpush.bf16.msra.mxu0 %v2768
    %2802 = vmatpush.bf16.msra.mxu0 %v2767
    %2803 = vmatpush.bf16.msra.mxu0 %v2766
    %2804 = vmatpush.bf16.msra.mxu0 %v2765
    %2805 = vmatmul.bf16.gmra.mxu0 %v2663
    %v2806 = vpop.f32.mrf.mxu0
    %v2807 = vadd.f32 %v2699, %v2806
    %v2808 = vpop.f32.mrf.mxu0
    %v2809 = vadd.f32 %v2699, %v2808
    %2810 = vdwg.mxu0
    %2811 = vmatpush.bf16.msra.mxu0 %v2780
    %2812 = vmatpush.bf16.msra.mxu0 %v2779
    %2813 = vmatpush.bf16.msra.mxu0 %v2778
    %2814 = vmatpush.bf16.msra.mxu0 %v2777
    %2815 = vmatpush.bf16.msra.mxu0 %v2776
    %2816 = vmatpush.bf16.msra.mxu0 %v2775
    %2817 = vmatpush.bf16.msra.mxu0 %v2774
    %2818 = vmatpush.bf16.msra.mxu0 %v2773
    %2819 = vmatmul.bf16.gmra.mxu0 %v2664
    %v2820 = vpop.f32.mrf.mxu0
    %v2821 = vadd.f32 %v2807, %v2820
    %v2822 = vpop.f32.mrf.mxu0
    %v2823 = vadd.f32 %v2809, %v2822
    %2824 = vdwg.mxu0
    %v2825 = vxor.u32 %v2821, 2147483648
    %v2826 = vxor.u32 %v2823, 2147483648
    %v2827 = vmul.f32 %v2825, 1.442695
    %v2828 = vpow.pop %v2827
    %v2829 = vmul.f32 %v2826, 1.442695
    %v2830 = vpow.pop %v2829
    %v2831 = vadd.f32 %v2828, 1.0
    %v2832 = vadd.f32 %v2830, 1.0
    %v2833 = vrcp.pop %v2831
    %v2834 = vmul.f32 %v2831, %v2833
    %v2835 = vsub.f32 1.0, %v2834
    %v2836 = vmul.f32 %v2833, %v2835
    %v2837 = vadd.f32 %v2833, %v2836
    %vm2838 = vweird.f32 %v2831
    %vm2839 = vweird.f32 %v2833
    %vm2840 = vmor %vm2838, %vm2839
    %v2841 = vsel %vm2840, %v2833, %v2837
    %v2842 = vand.u32 2147483647, %v2831
    %vm2843 = vcmp.eq.f32.partialorder %v2842, 8.507059e+37
    %v2844 = vand.u32 %v2831, 2147483648
    %v2845 = vor.u32 1.1754944e-38, %v2844
    %v2846 = vsel %vm2843, %v2845, %v2841
    %v2847 = vmul.f32 1.0, %v2846
    %v2848 = vrcp.pop %v2832
    %v2849 = vmul.f32 %v2832, %v2848
    %v2850 = vsub.f32 1.0, %v2849
    %v2851 = vmul.f32 %v2848, %v2850
    %v2852 = vadd.f32 %v2848, %v2851
    %vm2853 = vweird.f32 %v2832
    %vm2854 = vweird.f32 %v2848
    %vm2855 = vmor %vm2853, %vm2854
    %v2856 = vsel %vm2855, %v2848, %v2852
    %v2857 = vand.u32 2147483647, %v2832
    %vm2858 = vcmp.eq.f32.partialorder %v2857, 8.507059e+37
    %v2859 = vand.u32 %v2832, 2147483648
    %v2860 = vor.u32 1.1754944e-38, %v2859
    %v2861 = vsel %vm2858, %v2860, %v2856
    %v2862 = vmul.f32 1.0, %v2861
    %v2863 = vpack.c.bf16 %v2847, %v2847
    %v2864 = vpack.c.bf16 %v2862, %v2862
    %2865 = vst [vmem:[#allocation11] sm:$0xf] %v2863
    %2866 = vst [vmem:[#allocation11 + $0x4] sm:$0xf] %v2864
    // Predicated region
    $region50: #{tpu_custom_call.1} parent=1 // pred_check
      _
    $region51: #{tpu_custom_call.1} parent=1 // pred_check_branch
      %2868 = sbr.rel (0) target = $region53
    $region52: #{tpu_custom_call.1} parent=1 // pred_region
      %2870 = vsyncadd [#allocation4], 0
      %s2871 = sshll.u32 [#allocation11], 4
      %s2872 = int_to_ptr.vmem [resolvable:$true] %s2871
      %s2873 = sshll.u32 %s7, 4
      %s2874 = int_to_ptr.hbm [resolvable:$true] %s2873
      %2879 = dma.vmem_to_hbm [thread:$0]  %s2872, 128, %s2874, [#allocation4], 64, 64, 4
    $region53: #{tpu_custom_call.1} parent=1 // pred_fallthru
      _
    // Predicated region
    $region54: #{tpu_custom_call.1} parent=1 // pred_check
      _
    $region55: #{tpu_custom_call.1} parent=1 // pred_check_branch
      %2881 = sbr.rel (0) target = $region57
    $region56: #{tpu_custom_call.1} parent=1 // pred_region
      %2883 = dma.done [#allocation4], 128
    $region57: #{tpu_custom_call.1} parent=1 // pred_fallthru
      _
    %2884 = vsyncpa [#allocation3], 1
    %2885 = vsyncpa [#allocation6], 1
    %2886 = vsyncpa [#allocation9], 1
    %2887 = vsyncpa [#allocation4], 1

</llo_original>
